<compile_context>
chip_gen: v5e
topology: v5e:2x2
jax: 0.10.0
libtpu: 0.0.40
codegen_flags: <defaults>
</compile_context>

<pallas_src>
import jax
import jax.numpy as jnp
from jax.experimental import pallas as pl
from jax.experimental.pallas import tpu as pltpu

# ---------------------------------------------------------------------------
# model hyper-parameters (small, consistent with the module's forward)
# ---------------------------------------------------------------------------
B = 8                  # batch (sublane-native)
N_NODES = 8            # timing-graph nodes per batch element
F_NODE = 16            # raw node-feature dim
GNN_DIM = 64           # MultiLayerTimingGNN(3, 64) output feature dim
IMG_C, IMG_H, IMG_W = 4, 16, 16
IMG_FLAT = IMG_C * IMG_H * IMG_W
CNN_DIM = 64           # CNN feature dim (so that cat([nf, lf]) is 128)
LSTM_H = 128           # nn.LSTMCell(128, 128)
NET_ARCH = (32, 32)    # mlp hidden layers (zero-padded to MLP_PAD lanes)
MLP_PAD = 128          # lane-padded hidden width
ACTION_DIM = 8
OUT_PAD = 128          # lane-padded logits / probs width

NEG_INF = jnp.float32(-1e30)   # baked into padded logit-bias lanes


def _policy_kernel(nf_ref, img_ref, h0_ref, c0_ref, pool_ref,
                   gnn_w_ref, gnn_b_ref, cnn_w_ref, cnn_b_ref,
                   wx_gnn_ref, wx_cnn_ref, whh_ref, lstm_b_ref,
                   w1_ref, b1_ref, w2_ref, b2_ref, w3_ref, b3_ref,
                   probs_ref, ht_ref, ct_ref,
                   h_scr, c_scr):
    f32 = jnp.float32
    bf16 = jnp.bfloat16
    t = pl.program_id(0)

    # ---- carry init: load (h0, c0) into VMEM scratch at the first timestep ----
    @pl.when(t == 0)
    def _():
        h_scr[...] = h0_ref[...]
        c_scr[...] = c0_ref[...]

    # ---- GNN stand-in: per-node Linear + ReLU, then mean-node pooling via MXU matmul ----
    # TODO(synk): MultiLayerTimingGNN(3, 64) message passing is not defined in the source;
    # a per-node projection + mean pooling (constant 1/N pooling matrix) is used instead.
    node_h = jnp.maximum(
        jnp.dot(nf_ref[0], gnn_w_ref[...], preferred_element_type=f32) + gnn_b_ref[...],
        0.0)                                                        # (B*N, GNN_DIM) f32
    nfeat = jnp.dot(pool_ref[...], node_h.astype(bf16),
                    preferred_element_type=f32)                     # (B, GNN_DIM)

    # ---- CNN stand-in: flatten (done in wrapper) + Linear + ReLU ----
    # TODO(synk): models.CNN architecture is not defined in the source; flatten + linear
    # projection to 64 features is used in its place.
    lf = jnp.maximum(
        jnp.dot(img_ref[0], cnn_w_ref[...], preferred_element_type=f32) + cnn_b_ref[...],
        0.0)                                                        # (B, CNN_DIM)

    h_prev = h_scr[...]
    c_prev = c_scr[...]

    # ---- nn.LSTMCell(128, 128): split input-weight rows instead of cat([nf, lf]),
    #      single folded bias (b_ih + b_hh).  Gate column order is (i, f, o, g);
    #      permute PyTorch's (i, f, g, o) columns at weight-load time if porting real weights.
    gates = (jnp.dot(nfeat.astype(bf16), wx_gnn_ref[...], preferred_element_type=f32)
             + jnp.dot(lf.astype(bf16), wx_cnn_ref[...], preferred_element_type=f32)
             + jnp.dot(h_prev.astype(bf16), whh_ref[...], preferred_element_type=f32)
             + lstm_b_ref[...])                                     # (B, 4*LSTM_H) f32

    sig = jax.nn.sigmoid(gates[:, :3 * LSTM_H])                     # one contiguous EUP stream
    i_g = sig[:, 0 * LSTM_H:1 * LSTM_H]
    f_g = sig[:, 1 * LSTM_H:2 * LSTM_H]
    o_g = sig[:, 2 * LSTM_H:3 * LSTM_H]
    g_g = jnp.tanh(gates[:, 3 * LSTM_H:4 * LSTM_H])

    c_t = f_g * c_prev + i_g * g_g
    h_t = o_g * jnp.tanh(c_t)
    h_scr[...] = h_t
    c_scr[...] = c_t

    # ---- mlp(128 -> net_arch -> action_dim), lane-padded to 128 wide ----
    z = jnp.maximum(jnp.dot(h_t.astype(bf16), w1_ref[...],
                            preferred_element_type=f32) + b1_ref[...], 0.0)
    z = jnp.maximum(jnp.dot(z.astype(bf16), w2_ref[...],
                            preferred_element_type=f32) + b2_ref[...], 0.0)
    # b3's padded lanes hold -1e30, so the padded logits never need an in-kernel mask.
    logits = jnp.dot(z.astype(bf16), w3_ref[...],
                     preferred_element_type=f32) + b3_ref[...]      # (B, OUT_PAD)

    # ---- th.softmax(pi, dim=-1), stable, denominator on the EUP ----
    m = jnp.max(logits, axis=-1, keepdims=True)
    e = jnp.exp(logits - m)                  # padded lanes: exp(-1e30 - m) == 0 exactly
    denom = jnp.sum(e, axis=-1, keepdims=True)
    probs_ref[0] = e * pl.reciprocal(denom, approx=True)

    # ---- emit final recurrent state once, at the last timestep ----
    @pl.when(t == pl.num_programs(0) - 1)
    def _():
        ht_ref[...] = h_t
        ct_ref[...] = c_t


def _const_spec(shape):
    # Constant block index across the timestep grid -> loaded into VMEM once, never re-DMA'd.
    return pl.BlockSpec(shape, lambda t, _s=len(shape): (0,) * _s)


@jax.jit
def policy_rollout(nf_seq, img_seq_nchw, h0, c0, params):
    """Run T recurrent PolicyNet.forward steps in one pallas_call.

    nf_seq:       (T, B, N_NODES, F_NODE) float32
    img_seq_nchw: (T, B, C, H, W)         float32
    Returns (probs (T, B, ACTION_DIM), (h_T, c_T)).
    """
    T = nf_seq.shape[0]
    # glue reshapes + bf16 downcast done outside the kernel
    nf = nf_seq.reshape(T, B * N_NODES, F_NODE).astype(jnp.bfloat16)
    img = img_seq_nchw.reshape(T, B, IMG_FLAT).astype(jnp.bfloat16)

    inputs = (
        nf, img, h0, c0,
        params["pool"],
        params["gnn_w"], params["gnn_b"],
        params["cnn_w"], params["cnn_b"],
        params["w_x_gnn"], params["w_x_cnn"], params["w_hh"], params["lstm_b"],
        params["mlp_w1"], params["mlp_b1"],
        params["mlp_w2"], params["mlp_b2"],
        params["mlp_w3"], params["mlp_b3"],
    )

    grid_spec = pltpu.PrefetchScalarGridSpec(
        num_scalar_prefetch=0,
        grid=(T,),
        in_specs=[
            pl.BlockSpec((1, B * N_NODES, F_NODE), lambda t: (t, 0, 0)),   # per-step node feats
            pl.BlockSpec((1, B, IMG_FLAT), lambda t: (t, 0, 0)),           # per-step image
            _const_spec((B, LSTM_H)),                                      # h0
            _const_spec((B, LSTM_H)),                                      # c0
            _const_spec((B, B * N_NODES)),                                 # mean-node pooling
            _const_spec((F_NODE, GNN_DIM)), _const_spec((1, GNN_DIM)),
            _const_spec((IMG_FLAT, CNN_DIM)), _const_spec((1, CNN_DIM)),
            _const_spec((GNN_DIM, 4 * LSTM_H)), _const_spec((CNN_DIM, 4 * LSTM_H)),
            _const_spec((LSTM_H, 4 * LSTM_H)), _const_spec((1, 4 * LSTM_H)),
            _const_spec((LSTM_H, MLP_PAD)), _const_spec((1, MLP_PAD)),
            _const_spec((MLP_PAD, MLP_PAD)), _const_spec((1, MLP_PAD)),
            _const_spec((MLP_PAD, OUT_PAD)), _const_spec((1, OUT_PAD)),
        ],
        out_specs=(
            pl.BlockSpec((1, B, OUT_PAD), lambda t: (t, 0, 0)),            # per-step probs (lane-dense)
            pl.BlockSpec((B, LSTM_H), lambda t: (0, 0)),                   # h_T (resident)
            pl.BlockSpec((B, LSTM_H), lambda t: (0, 0)),                   # c_T (resident)
        ),
        scratch_shapes=[pltpu.VMEM((B, LSTM_H), jnp.float32),              # h carry
                        pltpu.VMEM((B, LSTM_H), jnp.float32)],             # c carry
    )

    probs_pad, h_t, c_t = pl.pallas_call(
        _policy_kernel,
        out_shape=(jax.ShapeDtypeStruct((T, B, OUT_PAD), jnp.float32),
                   jax.ShapeDtypeStruct((B, LSTM_H), jnp.float32),
                   jax.ShapeDtypeStruct((B, LSTM_H), jnp.float32)),
        grid_spec=grid_spec,
        compiler_params=pltpu.CompilerParams(
            dimension_semantics=("arbitrary",)),   # recurrence over timesteps
    )(*inputs)

    return probs_pad[..., :ACTION_DIM], (h_t, c_t)


def policy_net_forward(nf_nodes, image_nchw, h_prev, c_prev, params):
    """Single-step forward matching PolicyNet.forward's contract:
    returns (probas (B, action_dim), (h_t, c_t))."""
    probs, (h_t, c_t) = policy_rollout(nf_nodes[None], image_nchw[None], h_prev, c_prev, params)
    return probs[0].reshape(-1, ACTION_DIM), (h_t, c_t)


def init_params(key):
    """Deterministic synthetic parameter init (stand-in for layer_init).
    Weight matrices are stored bf16 / pre-transposed (in, out); biases stay f32."""
    ks = jax.random.split(key, 10)
    s = 0.1
    bf16, f32 = jnp.bfloat16, jnp.float32

    def rnd(k, shape):
        return s * jax.random.normal(k, shape, f32)

    # mean-node pooling matrix: block-diagonal 1/N
    pool = jnp.kron(jnp.eye(B, dtype=f32), jnp.full((1, N_NODES), 1.0 / N_NODES, f32))

    # MLP weights zero-padded to lane-native widths (padded units stay exactly zero)
    w1 = jnp.zeros((LSTM_H, MLP_PAD), f32).at[:, :NET_ARCH[0]].set(
        rnd(ks[4], (LSTM_H, NET_ARCH[0])))
    w2 = jnp.zeros((MLP_PAD, MLP_PAD), f32).at[:NET_ARCH[0], :NET_ARCH[1]].set(
        rnd(ks[5], (NET_ARCH[0], NET_ARCH[1])))
    w3 = jnp.zeros((MLP_PAD, OUT_PAD), f32).at[:NET_ARCH[1], :ACTION_DIM].set(
        rnd(ks[6], (NET_ARCH[1], ACTION_DIM)))
    # logit bias: real lanes = 0, padded lanes = -1e30 (masking baked in, no per-step iota/where)
    b3 = jnp.full((1, OUT_PAD), NEG_INF, f32).at[:, :ACTION_DIM].set(0.0)

    return {
        "pool": pool.astype(bf16),
        "gnn_w": rnd(ks[0], (F_NODE, GNN_DIM)).astype(bf16),
        "gnn_b": jnp.zeros((1, GNN_DIM), f32),
        "cnn_w": rnd(ks[1], (IMG_FLAT, CNN_DIM)).astype(bf16),
        "cnn_b": jnp.zeros((1, CNN_DIM), f32),
        # LSTMCell weights, transposed (in, 4H); input-weight split into GNN/CNN row halves,
        # gate column order (i, f, o, g); bias = b_ih + b_hh folded.
        "w_x_gnn": rnd(ks[2], (GNN_DIM, 4 * LSTM_H)).astype(bf16),
        "w_x_cnn": rnd(ks[3], (CNN_DIM, 4 * LSTM_H)).astype(bf16),
        "w_hh": rnd(ks[7], (LSTM_H, 4 * LSTM_H)).astype(bf16),
        "lstm_b": jnp.zeros((1, 4 * LSTM_H), f32),
        "mlp_w1": w1.astype(bf16), "mlp_b1": jnp.zeros((1, MLP_PAD), f32),
        "mlp_w2": w2.astype(bf16), "mlp_b2": jnp.zeros((1, MLP_PAD), f32),
        "mlp_w3": w3.astype(bf16), "mlp_b3": b3,
    }


if __name__ == "__main__":
    key = jax.random.PRNGKey(0)
    k_nf, k_img, k_h, k_c, k_par = jax.random.split(key, 5)

    T = 8
    nf_seq = jax.random.normal(k_nf, (T, B, N_NODES, F_NODE), jnp.float32)
    img_seq = jax.random.normal(k_img, (T, B, IMG_C, IMG_H, IMG_W), jnp.float32)  # NCHW per step
    h0 = jax.random.normal(k_h, (B, LSTM_H), jnp.float32)
    c0 = jax.random.normal(k_c, (B, LSTM_H), jnp.float32)
    params = init_params(k_par)

    # multi-step rollout (weights resident in VMEM across the timestep grid)
    probs_seq, (h_t, c_t) = policy_rollout(nf_seq, img_seq, h0, c0, params)
    jax.block_until_ready((probs_seq, h_t, c_t))

    assert probs_seq.shape == (T, B, ACTION_DIM)
    assert h_t.shape == (B, LSTM_H) and c_t.shape == (B, LSTM_H)
    assert bool(jnp.all(jnp.abs(jnp.sum(probs_seq, axis=-1) - 1.0) < 5e-3))
    assert bool(jnp.all(probs_seq >= 0.0))

    # single-step call matching the original PolicyNet.forward contract
    probas, (h1, c1) = policy_net_forward(nf_seq[0], img_seq[0], h0, c0, params)
    jax.block_until_ready((probas, h1, c1))
    assert probas.shape == (B, ACTION_DIM)
    assert bool(jnp.allclose(probas, probs_seq[0], atol=1e-3))

    print("KERNEL_OK")
</pallas_src>

<mosaic_0001>
module attributes {stable_mosaic.version = 11 : i64} {
  func.func @_policy_kernel(%arg0: i32, %arg1: memref<1x64x16xbf16, #tpu.memory_space<vmem>>, %arg2: memref<1x8x1024xbf16, #tpu.memory_space<vmem>>, %arg3: memref<8x128xf32, #tpu.memory_space<vmem>>, %arg4: memref<8x128xf32, #tpu.memory_space<vmem>>, %arg5: memref<8x64xbf16, #tpu.memory_space<vmem>>, %arg6: memref<16x64xbf16, #tpu.memory_space<vmem>>, %arg7: memref<1x64xf32, #tpu.memory_space<vmem>>, %arg8: memref<1024x64xbf16, #tpu.memory_space<vmem>>, %arg9: memref<1x64xf32, #tpu.memory_space<vmem>>, %arg10: memref<64x512xbf16, #tpu.memory_space<vmem>>, %arg11: memref<64x512xbf16, #tpu.memory_space<vmem>>, %arg12: memref<128x512xbf16, #tpu.memory_space<vmem>>, %arg13: memref<1x512xf32, #tpu.memory_space<vmem>>, %arg14: memref<128x128xbf16, #tpu.memory_space<vmem>>, %arg15: memref<1x128xf32, #tpu.memory_space<vmem>>, %arg16: memref<128x128xbf16, #tpu.memory_space<vmem>>, %arg17: memref<1x128xf32, #tpu.memory_space<vmem>>, %arg18: memref<128x128xbf16, #tpu.memory_space<vmem>>, %arg19: memref<1x128xf32, #tpu.memory_space<vmem>>, %arg20: memref<1x8x128xf32, #tpu.memory_space<vmem>>, %arg21: memref<8x128xf32, #tpu.memory_space<vmem>>, %arg22: memref<8x128xf32, #tpu.memory_space<vmem>>, %arg23: memref<8x128xf32, #tpu.memory_space<vmem>>, %arg24: memref<8x128xf32, #tpu.memory_space<vmem>>) attributes {dimension_semantics = [#tpu.dimension_semantics<arbitrary>], iteration_bounds = array<i64: 8>, scalar_prefetch = 0 : i64, scratch_operands = 2 : i64, tpu.core_type = #tpu.core_type<tc>, window_params = [{transform_indices = @transform_0, window_bounds = array<i64: 1, 64, 16>}, {transform_indices = @transform_1, window_bounds = array<i64: 1, 8, 1024>}, {pipeline_mode = #tpu.pipeline_mode<synchronous>, transform_indices = @transform_2, window_bounds = array<i64: 8, 128>}, {pipeline_mode = #tpu.pipeline_mode<synchronous>, transform_indices = @transform_3, window_bounds = array<i64: 8, 128>}, {pipeline_mode = #tpu.pipeline_mode<synchronous>, transform_indices = @transform_4, window_bounds = array<i64: 8, 64>}, {pipeline_mode = #tpu.pipeline_mode<synchronous>, transform_indices = @transform_5, window_bounds = array<i64: 16, 64>}, {pipeline_mode = #tpu.pipeline_mode<synchronous>, transform_indices = @transform_6, window_bounds = array<i64: 1, 64>}, {pipeline_mode = #tpu.pipeline_mode<synchronous>, transform_indices = @transform_7, window_bounds = array<i64: 1024, 64>}, {pipeline_mode = #tpu.pipeline_mode<synchronous>, transform_indices = @transform_8, window_bounds = array<i64: 1, 64>}, {pipeline_mode = #tpu.pipeline_mode<synchronous>, transform_indices = @transform_9, window_bounds = array<i64: 64, 512>}, {pipeline_mode = #tpu.pipeline_mode<synchronous>, transform_indices = @transform_10, window_bounds = array<i64: 64, 512>}, {pipeline_mode = #tpu.pipeline_mode<synchronous>, transform_indices = @transform_11, window_bounds = array<i64: 128, 512>}, {pipeline_mode = #tpu.pipeline_mode<synchronous>, transform_indices = @transform_12, window_bounds = array<i64: 1, 512>}, {pipeline_mode = #tpu.pipeline_mode<synchronous>, transform_indices = @transform_13, window_bounds = array<i64: 128, 128>}, {pipeline_mode = #tpu.pipeline_mode<synchronous>, transform_indices = @transform_14, window_bounds = array<i64: 1, 128>}, {pipeline_mode = #tpu.pipeline_mode<synchronous>, transform_indices = @transform_15, window_bounds = array<i64: 128, 128>}, {pipeline_mode = #tpu.pipeline_mode<synchronous>, transform_indices = @transform_16, window_bounds = array<i64: 1, 128>}, {pipeline_mode = #tpu.pipeline_mode<synchronous>, transform_indices = @transform_17, window_bounds = array<i64: 128, 128>}, {pipeline_mode = #tpu.pipeline_mode<synchronous>, transform_indices = @transform_18, window_bounds = array<i64: 1, 128>}, {transform_indices = @transform_19, window_bounds = array<i64: 1, 8, 128>}, {pipeline_mode = #tpu.pipeline_mode<synchronous>, transform_indices = @transform_20, window_bounds = array<i64: 8, 128>}, {pipeline_mode = #tpu.pipeline_mode<synchronous>, transform_indices = @transform_21, window_bounds = array<i64: 8, 128>}]} {
    %c0_i32 = arith.constant 0 : i32
    %0 = arith.cmpi eq, %arg0, %c0_i32 : i32
    %1 = arith.extui %0 : i1 to i32
    %c0_i32_0 = arith.constant 0 : i32
    %2 = arith.cmpi ne, %1, %c0_i32_0 : i32
    scf.if %2 {
      %c0_63 = arith.constant 0 : index
      %c0_64 = arith.constant 0 : index
      %96 = vector.load %arg3[%c0_63, %c0_64] : memref<8x128xf32, #tpu.memory_space<vmem>>, vector<8x128xf32>
      %c0_65 = arith.constant 0 : index
      %c0_66 = arith.constant 0 : index
      %97 = vector.load %arg23[%c0_65, %c0_66] : memref<8x128xf32, #tpu.memory_space<vmem>>, vector<8x128xf32>
      tpu.vector_store %arg23[%c0_65, %c0_66], %96 {strides = array<i32>} : memref<8x128xf32, #tpu.memory_space<vmem>>, vector<8x128xf32>,
      %c0_67 = arith.constant 0 : index
      %c0_68 = arith.constant 0 : index
      %98 = vector.load %arg4[%c0_67, %c0_68] : memref<8x128xf32, #tpu.memory_space<vmem>>, vector<8x128xf32>
      %c0_69 = arith.constant 0 : index
      %c0_70 = arith.constant 0 : index
      %99 = vector.load %arg24[%c0_69, %c0_70] : memref<8x128xf32, #tpu.memory_space<vmem>>, vector<8x128xf32>
      tpu.vector_store %arg24[%c0_69, %c0_70], %98 {strides = array<i32>} : memref<8x128xf32, #tpu.memory_space<vmem>>, vector<8x128xf32>,
    } else {
    }
    %c0 = arith.constant 0 : index
    %c0_1 = arith.constant 0 : index
    %c0_2 = arith.constant 0 : index
    %3 = vector.load %arg1[%c0, %c0_1, %c0_2] : memref<1x64x16xbf16, #tpu.memory_space<vmem>>, vector<1x64x16xbf16>
    %4 = vector.shape_cast %3 : vector<1x64x16xbf16> to vector<64x16xbf16>
    %c0_3 = arith.constant 0 : index
    %c0_4 = arith.constant 0 : index
    %5 = vector.load %arg6[%c0_3, %c0_4] : memref<16x64xbf16, #tpu.memory_space<vmem>>, vector<16x64xbf16>
    %cst = arith.constant dense<0.000000e+00> : vector<64x64xf32>
    %6 = tpu.matmul %4, %5, %cst {dimension_numbers = #tpu.dot_dimension_numbers<[1], [0], [0], [1], [0, 0, 1, 1], [], []>} : vector<64x16xbf16>, vector<16x64xbf16>, vector<64x64xf32> -> vector<64x64xf32>
    %c0_5 = arith.constant 0 : index
    %c0_6 = arith.constant 0 : index
    %7 = vector.load %arg7[%c0_5, %c0_6] : memref<1x64xf32, #tpu.memory_space<vmem>>, vector<1x64xf32>
    %8 = vector.broadcast %7 : vector<1x64xf32> to vector<64x64xf32>
    %9 = arith.addf %6, %8 : vector<64x64xf32>
    %cst_7 = arith.constant 0.000000e+00 : f32
    %10 = vector.broadcast %cst_7 : f32 to vector<64x64xf32>
    %11 = arith.maximumf %9, %10 : vector<64x64xf32>
    %c0_8 = arith.constant 0 : index
    %c0_9 = arith.constant 0 : index
    %12 = vector.load %arg5[%c0_8, %c0_9] : memref<8x64xbf16, #tpu.memory_space<vmem>>, vector<8x64xbf16>
    %13 = arith.truncf %11 : vector<64x64xf32> to vector<64x64xbf16>
    %cst_10 = arith.constant dense<0.000000e+00> : vector<8x64xf32>
    %14 = tpu.matmul %12, %13, %cst_10 {dimension_numbers = #tpu.dot_dimension_numbers<[1], [0], [0], [1], [0, 0, 1, 1], [], []>} : vector<8x64xbf16>, vector<64x64xbf16>, vector<8x64xf32> -> vector<8x64xf32>
    %c0_11 = arith.constant 0 : index
    %c0_12 = arith.constant 0 : index
    %c0_13 = arith.constant 0 : index
    %15 = vector.load %arg2[%c0_11, %c0_12, %c0_13] : memref<1x8x1024xbf16, #tpu.memory_space<vmem>>, vector<1x8x1024xbf16>
    %16 = vector.shape_cast %15 : vector<1x8x1024xbf16> to vector<8x1024xbf16>
    %c0_14 = arith.constant 0 : index
    %c0_15 = arith.constant 0 : index
    %17 = vector.load %arg8[%c0_14, %c0_15] : memref<1024x64xbf16, #tpu.memory_space<vmem>>, vector<1024x64xbf16>
    %cst_16 = arith.constant dense<0.000000e+00> : vector<8x64xf32>
    %18 = tpu.matmul %16, %17, %cst_16 {dimension_numbers = #tpu.dot_dimension_numbers<[1], [0], [0], [1], [0, 0, 1, 1], [], []>} : vector<8x1024xbf16>, vector<1024x64xbf16>, vector<8x64xf32> -> vector<8x64xf32>
    %c0_17 = arith.constant 0 : index
    %c0_18 = arith.constant 0 : index
    %19 = vector.load %arg9[%c0_17, %c0_18] : memref<1x64xf32, #tpu.memory_space<vmem>>, vector<1x64xf32>
    %20 = vector.broadcast %19 : vector<1x64xf32> to vector<8x64xf32>
    %21 = arith.addf %18, %20 : vector<8x64xf32>
    %cst_19 = arith.constant 0.000000e+00 : f32
    %22 = vector.broadcast %cst_19 : f32 to vector<8x64xf32>
    %23 = arith.maximumf %21, %22 : vector<8x64xf32>
    %c0_20 = arith.constant 0 : index
    %c0_21 = arith.constant 0 : index
    %24 = vector.load %arg23[%c0_20, %c0_21] : memref<8x128xf32, #tpu.memory_space<vmem>>, vector<8x128xf32>
    %c0_22 = arith.constant 0 : index
    %c0_23 = arith.constant 0 : index
    %25 = vector.load %arg24[%c0_22, %c0_23] : memref<8x128xf32, #tpu.memory_space<vmem>>, vector<8x128xf32>
    %26 = arith.truncf %14 : vector<8x64xf32> to vector<8x64xbf16>
    %c0_24 = arith.constant 0 : index
    %c0_25 = arith.constant 0 : index
    %27 = vector.load %arg10[%c0_24, %c0_25] : memref<64x512xbf16, #tpu.memory_space<vmem>>, vector<64x512xbf16>
    %cst_26 = arith.constant dense<0.000000e+00> : vector<8x512xf32>
    %28 = tpu.matmul %26, %27, %cst_26 {dimension_numbers = #tpu.dot_dimension_numbers<[1], [0], [0], [1], [0, 0, 1, 1], [], []>} : vector<8x64xbf16>, vector<64x512xbf16>, vector<8x512xf32> -> vector<8x512xf32>
    %29 = arith.truncf %23 : vector<8x64xf32> to vector<8x64xbf16>
    %c0_27 = arith.constant 0 : index
    %c0_28 = arith.constant 0 : index
    %30 = vector.load %arg11[%c0_27, %c0_28] : memref<64x512xbf16, #tpu.memory_space<vmem>>, vector<64x512xbf16>
    %cst_29 = arith.constant dense<0.000000e+00> : vector<8x512xf32>
    %31 = tpu.matmul %29, %30, %cst_29 {dimension_numbers = #tpu.dot_dimension_numbers<[1], [0], [0], [1], [0, 0, 1, 1], [], []>} : vector<8x64xbf16>, vector<64x512xbf16>, vector<8x512xf32> -> vector<8x512xf32>
    %32 = arith.addf %28, %31 : vector<8x512xf32>
    %33 = arith.truncf %24 : vector<8x128xf32> to vector<8x128xbf16>
    %c0_30 = arith.constant 0 : index
    %c0_31 = arith.constant 0 : index
    %34 = vector.load %arg12[%c0_30, %c0_31] : memref<128x512xbf16, #tpu.memory_space<vmem>>, vector<128x512xbf16>
    %cst_32 = arith.constant dense<0.000000e+00> : vector<8x512xf32>
    %35 = tpu.matmul %33, %34, %cst_32 {dimension_numbers = #tpu.dot_dimension_numbers<[1], [0], [0], [1], [0, 0, 1, 1], [], []>} : vector<8x128xbf16>, vector<128x512xbf16>, vector<8x512xf32> -> vector<8x512xf32>
    %36 = arith.addf %32, %35 : vector<8x512xf32>
    %c0_33 = arith.constant 0 : index
    %c0_34 = arith.constant 0 : index
    %37 = vector.load %arg13[%c0_33, %c0_34] : memref<1x512xf32, #tpu.memory_space<vmem>>, vector<1x512xf32>
    %38 = vector.broadcast %37 : vector<1x512xf32> to vector<8x512xf32>
    %39 = arith.addf %36, %38 : vector<8x512xf32>
    %40 = vector.extract_strided_slice %39 {offsets = [0, 0], sizes = [8, 384], strides = [1, 1]} : vector<8x512xf32> to vector<8x384xf32>
    %41 = arith.negf %40 : vector<8x384xf32>
    %42 = math.exp %41 : vector<8x384xf32>
    %cst_35 = arith.constant 1.000000e+00 : f32
    %43 = vector.broadcast %cst_35 : f32 to vector<8x384xf32>
    %44 = arith.addf %43, %42 : vector<8x384xf32>
    %45 = arith.divf %43, %44 : vector<8x384xf32>
    %46 = vector.extract_strided_slice %45 {offsets = [0, 0], sizes = [8, 128], strides = [1, 1]} : vector<8x384xf32> to vector<8x128xf32>
    %47 = vector.extract_strided_slice %45 {offsets = [0, 128], sizes = [8, 128], strides = [1, 1]} : vector<8x384xf32> to vector<8x128xf32>
    %48 = vector.extract_strided_slice %45 {offsets = [0, 256], sizes = [8, 128], strides = [1, 1]} : vector<8x384xf32> to vector<8x128xf32>
    %49 = vector.extract_strided_slice %39 {offsets = [0, 384], sizes = [8, 128], strides = [1, 1]} : vector<8x512xf32> to vector<8x128xf32>
    %50 = math.tanh %49 : vector<8x128xf32>
    %51 = arith.mulf %47, %25 : vector<8x128xf32>
    %52 = arith.mulf %46, %50 : vector<8x128xf32>
    %53 = arith.addf %51, %52 : vector<8x128xf32>
    %54 = math.tanh %53 : vector<8x128xf32>
    %55 = arith.mulf %48, %54 : vector<8x128xf32>
    %c0_36 = arith.constant 0 : index
    %c0_37 = arith.constant 0 : index
    %56 = vector.load %arg23[%c0_36, %c0_37] : memref<8x128xf32, #tpu.memory_space<vmem>>, vector<8x128xf32>
    tpu.vector_store %arg23[%c0_36, %c0_37], %55 {strides = array<i32>} : memref<8x128xf32, #tpu.memory_space<vmem>>, vector<8x128xf32>,
    %c0_38 = arith.constant 0 : index
    %c0_39 = arith.constant 0 : index
    %57 = vector.load %arg24[%c0_38, %c0_39] : memref<8x128xf32, #tpu.memory_space<vmem>>, vector<8x128xf32>
    tpu.vector_store %arg24[%c0_38, %c0_39], %53 {strides = array<i32>} : memref<8x128xf32, #tpu.memory_space<vmem>>, vector<8x128xf32>,
    %58 = arith.truncf %55 : vector<8x128xf32> to vector<8x128xbf16>
    %c0_40 = arith.constant 0 : index
    %c0_41 = arith.constant 0 : index
    %59 = vector.load %arg14[%c0_40, %c0_41] : memref<128x128xbf16, #tpu.memory_space<vmem>>, vector<128x128xbf16>
    %cst_42 = arith.constant dense<0.000000e+00> : vector<8x128xf32>
    %60 = tpu.matmul %58, %59, %cst_42 {dimension_numbers = #tpu.dot_dimension_numbers<[1], [0], [0], [1], [0, 0, 1, 1], [], []>} : vector<8x128xbf16>, vector<128x128xbf16>, vector<8x128xf32> -> vector<8x128xf32>
    %c0_43 = arith.constant 0 : index
    %c0_44 = arith.constant 0 : index
    %61 = vector.load %arg15[%c0_43, %c0_44] : memref<1x128xf32, #tpu.memory_space<vmem>>, vector<1x128xf32>
    %62 = vector.broadcast %61 : vector<1x128xf32> to vector<8x128xf32>
    %63 = arith.addf %60, %62 : vector<8x128xf32>
    %cst_45 = arith.constant 0.000000e+00 : f32
    %64 = vector.broadcast %cst_45 : f32 to vector<8x128xf32>
    %65 = arith.maximumf %63, %64 : vector<8x128xf32>
    %66 = arith.truncf %65 : vector<8x128xf32> to vector<8x128xbf16>
    %c0_46 = arith.constant 0 : index
    %c0_47 = arith.constant 0 : index
    %67 = vector.load %arg16[%c0_46, %c0_47] : memref<128x128xbf16, #tpu.memory_space<vmem>>, vector<128x128xbf16>
    %cst_48 = arith.constant dense<0.000000e+00> : vector<8x128xf32>
    %68 = tpu.matmul %66, %67, %cst_48 {dimension_numbers = #tpu.dot_dimension_numbers<[1], [0], [0], [1], [0, 0, 1, 1], [], []>} : vector<8x128xbf16>, vector<128x128xbf16>, vector<8x128xf32> -> vector<8x128xf32>
    %c0_49 = arith.constant 0 : index
    %c0_50 = arith.constant 0 : index
    %69 = vector.load %arg17[%c0_49, %c0_50] : memref<1x128xf32, #tpu.memory_space<vmem>>, vector<1x128xf32>
    %70 = vector.broadcast %69 : vector<1x128xf32> to vector<8x128xf32>
    %71 = arith.addf %68, %70 : vector<8x128xf32>
    %cst_51 = arith.constant 0.000000e+00 : f32
    %72 = vector.broadcast %cst_51 : f32 to vector<8x128xf32>
    %73 = arith.maximumf %71, %72 : vector<8x128xf32>
    %74 = arith.truncf %73 : vector<8x128xf32> to vector<8x128xbf16>
    %c0_52 = arith.constant 0 : index
    %c0_53 = arith.constant 0 : index
    %75 = vector.load %arg18[%c0_52, %c0_53] : memref<128x128xbf16, #tpu.memory_space<vmem>>, vector<128x128xbf16>
    %cst_54 = arith.constant dense<0.000000e+00> : vector<8x128xf32>
    %76 = tpu.matmul %74, %75, %cst_54 {dimension_numbers = #tpu.dot_dimension_numbers<[1], [0], [0], [1], [0, 0, 1, 1], [], []>} : vector<8x128xbf16>, vector<128x128xbf16>, vector<8x128xf32> -> vector<8x128xf32>
    %c0_55 = arith.constant 0 : index
    %c0_56 = arith.constant 0 : index
    %77 = vector.load %arg19[%c0_55, %c0_56] : memref<1x128xf32, #tpu.memory_space<vmem>>, vector<1x128xf32>
    %78 = vector.broadcast %77 : vector<1x128xf32> to vector<8x128xf32>
    %79 = arith.addf %76, %78 : vector<8x128xf32>
    %cst_57 = arith.constant dense<0xFF800000> : vector<8xf32>
    %80 = vector.multi_reduction <maximumf>, %79, %cst_57 [1] : vector<8x128xf32> to vector<8xf32>
    %81 = vector.shape_cast %80 : vector<8xf32> to vector<8x1xf32>
    %82 = vector.broadcast %81 : vector<8x1xf32> to vector<8x128xf32>
    %83 = arith.subf %79, %82 : vector<8x128xf32>
    %84 = math.exp %83 : vector<8x128xf32>
    %cst_58 = arith.constant dense<0.000000e+00> : vector<8xf32>
    %85 = vector.multi_reduction <add>, %84, %cst_58 [1] : vector<8x128xf32> to vector<8xf32>
    %86 = vector.shape_cast %85 : vector<8xf32> to vector<8x1xf32>
    %87 = tpu.reciprocal %86 {approx = true} : vector<8x1xf32> -> vector<8x1xf32>
    %88 = vector.broadcast %87 : vector<8x1xf32> to vector<8x128xf32>
    %89 = arith.mulf %84, %88 : vector<8x128xf32>
    %c0_59 = arith.constant 0 : index
    %c0_60 = arith.constant 0 : index
    %c0_61 = arith.constant 0 : index
    %90 = vector.load %arg20[%c0_59, %c0_60, %c0_61] : memref<1x8x128xf32, #tpu.memory_space<vmem>>, vector<1x8x128xf32>
    %91 = vector.shape_cast %90 : vector<1x8x128xf32> to vector<8x128xf32>
    %92 = vector.shape_cast %89 : vector<8x128xf32> to vector<1x8x128xf32>
    tpu.vector_store %arg20[%c0_59, %c0_60, %c0_61], %92 {strides = array<i32>} : memref<1x8x128xf32, #tpu.memory_space<vmem>>, vector<1x8x128xf32>,
    %c7_i32 = arith.constant 7 : i32
    %93 = arith.cmpi eq, %arg0, %c7_i32 : i32
    %94 = arith.extui %93 : i1 to i32
    %c0_i32_62 = arith.constant 0 : i32
    %95 = arith.cmpi ne, %94, %c0_i32_62 : i32
    scf.if %95 {
      %c0_63 = arith.constant 0 : index
      %c0_64 = arith.constant 0 : index
      %96 = vector.load %arg21[%c0_63, %c0_64] : memref<8x128xf32, #tpu.memory_space<vmem>>, vector<8x128xf32>
      tpu.vector_store %arg21[%c0_63, %c0_64], %55 {strides = array<i32>} : memref<8x128xf32, #tpu.memory_space<vmem>>, vector<8x128xf32>,
      %c0_65 = arith.constant 0 : index
      %c0_66 = arith.constant 0 : index
      %97 = vector.load %arg22[%c0_65, %c0_66] : memref<8x128xf32, #tpu.memory_space<vmem>>, vector<8x128xf32>
      tpu.vector_store %arg22[%c0_65, %c0_66], %53 {strides = array<i32>} : memref<8x128xf32, #tpu.memory_space<vmem>>, vector<8x128xf32>,
    } else {
    }
    return
  }
  func.func @transform_0(%arg0: i32) -> (i32, i32, i32) {
    %c0_i32 = arith.constant 0 : i32
    %c0_i32_0 = arith.constant 0 : i32
    %c0_i32_1 = arith.constant 0 : i32
    return %arg0, %c0_i32, %c0_i32_0 : i32, i32, i32
  }
  func.func @transform_1(%arg0: i32) -> (i32, i32, i32) {
    %c0_i32 = arith.constant 0 : i32
    %c0_i32_0 = arith.constant 0 : i32
    %c0_i32_1 = arith.constant 0 : i32
    return %arg0, %c0_i32, %c0_i32_0 : i32, i32, i32
  }
  func.func @transform_2(%arg0: i32) -> (i32, i32) {
    %c0_i32 = arith.constant 0 : i32
    %c0_i32_0 = arith.constant 0 : i32
    %c0_i32_1 = arith.constant 0 : i32
    return %c0_i32, %c0_i32_0 : i32, i32
  }
  func.func @transform_3(%arg0: i32) -> (i32, i32) {
    %c0_i32 = arith.constant 0 : i32
    %c0_i32_0 = arith.constant 0 : i32
    %c0_i32_1 = arith.constant 0 : i32
    return %c0_i32, %c0_i32_0 : i32, i32
  }
  func.func @transform_4(%arg0: i32) -> (i32, i32) {
    %c0_i32 = arith.constant 0 : i32
    %c0_i32_0 = arith.constant 0 : i32
    %c0_i32_1 = arith.constant 0 : i32
    return %c0_i32, %c0_i32_0 : i32, i32
  }
  func.func @transform_5(%arg0: i32) -> (i32, i32) {
    %c0_i32 = arith.constant 0 : i32
    %c0_i32_0 = arith.constant 0 : i32
    %c0_i32_1 = arith.constant 0 : i32
    return %c0_i32, %c0_i32_0 : i32, i32
  }
  func.func @transform_6(%arg0: i32) -> (i32, i32) {
    %c0_i32 = arith.constant 0 : i32
    %c0_i32_0 = arith.constant 0 : i32
    %c0_i32_1 = arith.constant 0 : i32
    return %c0_i32, %c0_i32_0 : i32, i32
  }
  func.func @transform_7(%arg0: i32) -> (i32, i32) {
    %c0_i32 = arith.constant 0 : i32
    %c0_i32_0 = arith.constant 0 : i32
    %c0_i32_1 = arith.constant 0 : i32
    return %c0_i32, %c0_i32_0 : i32, i32
  }
  func.func @transform_8(%arg0: i32) -> (i32, i32) {
    %c0_i32 = arith.constant 0 : i32
    %c0_i32_0 = arith.constant 0 : i32
    %c0_i32_1 = arith.constant 0 : i32
    return %c0_i32, %c0_i32_0 : i32, i32
  }
  func.func @transform_9(%arg0: i32) -> (i32, i32) {
    %c0_i32 = arith.constant 0 : i32
    %c0_i32_0 = arith.constant 0 : i32
    %c0_i32_1 = arith.constant 0 : i32
    return %c0_i32, %c0_i32_0 : i32, i32
  }
  func.func @transform_10(%arg0: i32) -> (i32, i32) {
    %c0_i32 = arith.constant 0 : i32
    %c0_i32_0 = arith.constant 0 : i32
    %c0_i32_1 = arith.constant 0 : i32
    return %c0_i32, %c0_i32_0 : i32, i32
  }
  func.func @transform_11(%arg0: i32) -> (i32, i32) {
    %c0_i32 = arith.constant 0 : i32
    %c0_i32_0 = arith.constant 0 : i32
    %c0_i32_1 = arith.constant 0 : i32
    return %c0_i32, %c0_i32_0 : i32, i32
  }
  func.func @transform_12(%arg0: i32) -> (i32, i32) {
    %c0_i32 = arith.constant 0 : i32
    %c0_i32_0 = arith.constant 0 : i32
    %c0_i32_1 = arith.constant 0 : i32
    return %c0_i32, %c0_i32_0 : i32, i32
  }
  func.func @transform_13(%arg0: i32) -> (i32, i32) {
    %c0_i32 = arith.constant 0 : i32
    %c0_i32_0 = arith.constant 0 : i32
    %c0_i32_1 = arith.constant 0 : i32
    return %c0_i32, %c0_i32_0 : i32, i32
  }
  func.func @transform_14(%arg0: i32) -> (i32, i32) {
    %c0_i32 = arith.constant 0 : i32
    %c0_i32_0 = arith.constant 0 : i32
    %c0_i32_1 = arith.constant 0 : i32
    return %c0_i32, %c0_i32_0 : i32, i32
  }
  func.func @transform_15(%arg0: i32) -> (i32, i32) {
    %c0_i32 = arith.constant 0 : i32
    %c0_i32_0 = arith.constant 0 : i32
    %c0_i32_1 = arith.constant 0 : i32
    return %c0_i32, %c0_i32_0 : i32, i32
  }
  func.func @transform_16(%arg0: i32) -> (i32, i32) {
    %c0_i32 = arith.constant 0 : i32
    %c0_i32_0 = arith.constant 0 : i32
    %c0_i32_1 = arith.constant 0 : i32
    return %c0_i32, %c0_i32_0 : i32, i32
  }
  func.func @transform_17(%arg0: i32) -> (i32, i32) {
    %c0_i32 = arith.constant 0 : i32
    %c0_i32_0 = arith.constant 0 : i32
    %c0_i32_1 = arith.constant 0 : i32
    return %c0_i32, %c0_i32_0 : i32, i32
  }
  func.func @transform_18(%arg0: i32) -> (i32, i32) {
    %c0_i32 = arith.constant 0 : i32
    %c0_i32_0 = arith.constant 0 : i32
    %c0_i32_1 = arith.constant 0 : i32
    return %c0_i32, %c0_i32_0 : i32, i32
  }
  func.func @transform_19(%arg0: i32) -> (i32, i32, i32) {
    %c0_i32 = arith.constant 0 : i32
    %c0_i32_0 = arith.constant 0 : i32
    %c0_i32_1 = arith.constant 0 : i32
    return %arg0, %c0_i32, %c0_i32_0 : i32, i32, i32
  }
  func.func @transform_20(%arg0: i32) -> (i32, i32) {
    %c0_i32 = arith.constant 0 : i32
    %c0_i32_0 = arith.constant 0 : i32
    %c0_i32_1 = arith.constant 0 : i32
    return %c0_i32, %c0_i32_0 : i32, i32
  }
  func.func @transform_21(%arg0: i32) -> (i32, i32) {
    %c0_i32 = arith.constant 0 : i32
    %c0_i32_0 = arith.constant 0 : i32
    %c0_i32_1 = arith.constant 0 : i32
    return %c0_i32, %c0_i32_0 : i32, i32
  }
}

</mosaic_0001>

<llo_original>
// kernel: policy_rollout.1
$region0: #{policy_rollout.1}
  #allocation0 [shape = 'u32[]', space=smem, size = 0x4, offset = 0x4, fixed_abs, tag = 'smem constant byte address 0x4 - core index']
  #allocation1 [shape = 'u32[72,128]{1,0:T(1,128)}', space=vmem, size = 0x9000, scoped, tag = 'internal scratch']
  #allocation2 [shape = 'f32[8,128]{1,0:T(8,128)}', space=vmem, size = 0x1000, scoped, tag = 'scratch operand']
  #allocation3 [shape = 'f32[8,128]{1,0:T(8,128)}', space=vmem, size = 0x1000, scoped, tag = 'scratch operand']
  %s0 = inlined_call_operand.vmem [shape: bf16[8,64,16], index: 0, kind: input, shape index: {}]
  %s1 = inlined_call_operand.vmem [shape: bf16[8,8,1024], index: 1, kind: input, shape index: {}]
  %s2 = inlined_call_operand.vmem [shape: f32[8,128], index: 2, kind: input, shape index: {}]
  %s3 = inlined_call_operand.vmem [shape: f32[8,128], index: 3, kind: input, shape index: {}]
  %s4 = inlined_call_operand.vmem [shape: bf16[8,64], index: 4, kind: input, shape index: {}]
  %s5 = inlined_call_operand.vmem [shape: bf16[16,64], index: 5, kind: input, shape index: {}]
  %s6 = inlined_call_operand.vmem [shape: f32[1,64], index: 6, kind: input, shape index: {}]
  %s7 = inlined_call_operand.vmem [shape: bf16[1024,64], index: 7, kind: input, shape index: {}]
  %s8 = inlined_call_operand.vmem [shape: f32[1,64], index: 8, kind: input, shape index: {}]
  %s9 = inlined_call_operand.vmem [shape: bf16[64,512], index: 9, kind: input, shape index: {}]
  %s10 = inlined_call_operand.vmem [shape: bf16[64,512], index: 10, kind: input, shape index: {}]
  %s11 = inlined_call_operand.vmem [shape: bf16[128,512], index: 11, kind: input, shape index: {}]
  %s12 = inlined_call_operand.vmem [shape: f32[1,512], index: 12, kind: input, shape index: {}]
  %s13 = inlined_call_operand.vmem [shape: bf16[128,128], index: 13, kind: input, shape index: {}]
  %s14 = inlined_call_operand.vmem [shape: f32[1,128], index: 14, kind: input, shape index: {}]
  %s15 = inlined_call_operand.vmem [shape: bf16[128,128], index: 15, kind: input, shape index: {}]
  %s16 = inlined_call_operand.vmem [shape: f32[1,128], index: 16, kind: input, shape index: {}]
  %s17 = inlined_call_operand.vmem [shape: bf16[128,128], index: 17, kind: input, shape index: {}]
  %s18 = inlined_call_operand.vmem [shape: f32[1,128], index: 18, kind: input, shape index: {}]
  %s19 = inlined_call_operand.hbm [shape: f32[8,8,128], index: 19, kind: output, shape index: {0}]
  %s20 = inlined_call_operand.hbm [shape: f32[8,128], index: 20, kind: output, shape index: {1}]
  %s21 = inlined_call_operand.hbm [shape: f32[8,128], index: 21, kind: output, shape index: {2}]
  %22 = xla_tuple %s19, %s20, %s21
  %s23 = sld [smem:[#allocation0]]
  $region133: #{policy_rollout.1} parent=0
    _
  %s25 = ssub.s32 1, %s23
  %s26 = scalar_select 0, %s25, %s23
  $region1: #{policy_rollout.1} parent=0
    #allocation4 [shape = 'u8[8192]{0}', space=vmem, size = 0x2000, scoped, tag = 'output window, operand 0']
    #allocation5 [shape = 's32[2]{0}', space=sflag, size = 0x8, scoped, tag = 'scoped memory for policy_rollout.1']
    #allocation6 [shape = 'u8[4096]{0}', space=vmem, size = 0x1000, scoped, tag = 'output window, operand 1, single buffered']
    #allocation7 [shape = 's32[1]{0}', space=sflag, size = 0x4, scoped, tag = 'scoped memory for policy_rollout.1']
    #allocation8 [shape = 'u8[4096]{0}', space=vmem, size = 0x1000, scoped, tag = 'output window, operand 2, single buffered']
    %27 = vsyncpa [#allocation5], 0
    %s28 = scalar_lea.sflag [#allocation5], 1
    %29 = vsyncpa %s28, 0
    %30 = vsyncpa [#allocation7], 0
    loop: start=0, step=1, limit=10
    $region2: #{policy_rollout.1} parent=1 // loop_pre_header
      _
    $region3: #{policy_rollout.1} parent=1 // loop_header
      %s32 = sphi 0, %s36
      %p33 = scmp.ge.s32.totalorder %s32, 10
      %s42 = sphi 0, %s44
      %s45 = sphi 0, %s42
      %s46 = sphi 0, %s45
      %s62 = sphi 0, %s46
      %s68 = sphi 0, %s70
      %s71 = sphi 0, %s68
      %s72 = sphi 0, %s71
      %s88 = sphi 0, %s72
      %s92 = sphi 0, %s92
      %s94 = sphi 0, %s92
      %s95 = sphi 0, %s94
      %s109 = sphi 0, %s95
      %s113 = sphi 0, %s113
      %s115 = sphi 0, %s113
      %s116 = sphi 0, %s115
      %s130 = sphi 0, %s116
      %s134 = sphi 0, %s134
      %s136 = sphi 0, %s134
      %s137 = sphi 0, %s136
      %s151 = sphi 0, %s137
      %s155 = sphi 0, %s155
      %s157 = sphi 0, %s155
      %s158 = sphi 0, %s157
      %s172 = sphi 0, %s158
      %s176 = sphi 0, %s176
      %s178 = sphi 0, %s176
      %s179 = sphi 0, %s178
      %s193 = sphi 0, %s179
      %s197 = sphi 0, %s197
      %s199 = sphi 0, %s197
      %s200 = sphi 0, %s199
      %s214 = sphi 0, %s200
      %s218 = sphi 0, %s218
      %s220 = sphi 0, %s218
      %s221 = sphi 0, %s220
      %s235 = sphi 0, %s221
      %s239 = sphi 0, %s239
      %s241 = sphi 0, %s239
      %s242 = sphi 0, %s241
      %s256 = sphi 0, %s242
      %s260 = sphi 0, %s260
      %s262 = sphi 0, %s260
      %s263 = sphi 0, %s262
      %s277 = sphi 0, %s263
      %s281 = sphi 0, %s281
      %s283 = sphi 0, %s281
      %s284 = sphi 0, %s283
      %s298 = sphi 0, %s284
      %s302 = sphi 0, %s302
      %s304 = sphi 0, %s302
      %s305 = sphi 0, %s304
      %s319 = sphi 0, %s305
      %s323 = sphi 0, %s323
      %s325 = sphi 0, %s323
      %s326 = sphi 0, %s325
      %s340 = sphi 0, %s326
      %s344 = sphi 0, %s344
      %s346 = sphi 0, %s344
      %s347 = sphi 0, %s346
      %s361 = sphi 0, %s347
      %s365 = sphi 0, %s365
      %s367 = sphi 0, %s365
      %s368 = sphi 0, %s367
      %s382 = sphi 0, %s368
      %s386 = sphi 0, %s386
      %s388 = sphi 0, %s386
      %s389 = sphi 0, %s388
      %s403 = sphi 0, %s389
      %s407 = sphi 0, %s407
      %s409 = sphi 0, %s407
      %s410 = sphi 0, %s409
      %s424 = sphi 0, %s410
      %s428 = sphi 0, %s428
      %s430 = sphi 0, %s428
      %s431 = sphi 0, %s430
      %s445 = sphi 0, %s431
      %s451 = sphi 0, %s453
      %s454 = sphi 0, %s451
      %s455 = sphi 0, %s454
      %s471 = sphi 0, %s455
      %s475 = sphi 0, %s475
      %s477 = sphi 0, %s475
      %s478 = sphi 0, %s477
      %s492 = sphi 0, %s478
      %s496 = sphi 0, %s496
      %s498 = sphi 0, %s496
      %s499 = sphi 0, %s498
      %s513 = sphi 0, %s499
    $region4: #{policy_rollout.1} parent=1 // loop_header_branch
      %35 = sbr.rel (%p33) target = $region8
    $region5: #{policy_rollout.1} parent=1 // loop_body
      %s37 = ssub.s32 %s32, 1
      %s38 = ssub.s32 %s32, 2
      %s39 = sadd.s32 %s32, 1
      %s40 = ssub.s32 %s32, %s39
      %p41 = scmp.eq.s32.totalorder %s40, 0
      %s43 = sadd.s32 %s42, 1
      %s44 = scalar_select %p41, %s42, %s43
      %p47 = pneg %p41
      %p48 = scmp.eq.s32.totalorder %s32, 7
      %p49 = por %p47, %p48
      %p50 = scmp.ne.s32.totalorder %s42, %s45
      %p51 = scmp.eq.s32.totalorder %s32, 0
      %p52 = por %p50, %p51
      %p53 = scmp.ne.s32.totalorder %s42, %s45
      %p54 = scmp.eq.s32.totalorder %s37, 7
      %p55 = por %p53, %p54
      %p56 = scmp.ne.s32.totalorder %s45, %s46
      %p57 = scmp.eq.s32.totalorder %s37, 0
      %p58 = por %p56, %p57
      %p59 = scmp.ne.s32.totalorder %s45, %s46
      %p60 = scmp.eq.s32.totalorder %s38, 7
      %p61 = por %p59, %p60
      %p63 = scmp.ne.s32.totalorder %s46, %s62
      %p64 = scmp.eq.s32.totalorder %s38, 0
      %p65 = por %p63, %p64
      %s66 = ssub.s32 %s32, %s39
      %p67 = scmp.eq.s32.totalorder %s66, 0
      %s69 = sadd.s32 %s68, 1
      %s70 = scalar_select %p67, %s68, %s69
      %p73 = pneg %p67
      %p74 = scmp.eq.s32.totalorder %s32, 7
      %p75 = por %p73, %p74
      %p76 = scmp.ne.s32.totalorder %s68, %s71
      %p77 = scmp.eq.s32.totalorder %s32, 0
      %p78 = por %p76, %p77
      %p79 = scmp.ne.s32.totalorder %s68, %s71
      %p80 = scmp.eq.s32.totalorder %s37, 7
      %p81 = por %p79, %p80
      %p82 = scmp.ne.s32.totalorder %s71, %s72
      %p83 = scmp.eq.s32.totalorder %s37, 0
      %p84 = por %p82, %p83
      %p85 = scmp.ne.s32.totalorder %s71, %s72
      %p86 = scmp.eq.s32.totalorder %s38, 7
      %p87 = por %p85, %p86
      %p89 = scmp.ne.s32.totalorder %s72, %s88
      %p90 = scmp.eq.s32.totalorder %s38, 0
      %p91 = por %p89, %p90
      %s93 = sadd.s32 %s92, 1
      %p96 = scmp.eq.s32.totalorder %s32, 7
      %p97 = scmp.ne.s32.totalorder %s92, %s94
      %p98 = scmp.eq.s32.totalorder %s32, 0
      %p99 = por %p97, %p98
      %p100 = scmp.ne.s32.totalorder %s92, %s94
      %p101 = scmp.eq.s32.totalorder %s37, 7
      %p102 = por %p100, %p101
      %p103 = scmp.ne.s32.totalorder %s94, %s95
      %p104 = scmp.eq.s32.totalorder %s37, 0
      %p105 = por %p103, %p104
      %p106 = scmp.ne.s32.totalorder %s94, %s95
      %p107 = scmp.eq.s32.totalorder %s38, 7
      %p108 = por %p106, %p107
      %p110 = scmp.ne.s32.totalorder %s95, %s109
      %p111 = scmp.eq.s32.totalorder %s38, 0
      %p112 = por %p110, %p111
      %s114 = sadd.s32 %s113, 1
      %p117 = scmp.eq.s32.totalorder %s32, 7
      %p118 = scmp.ne.s32.totalorder %s113, %s115
      %p119 = scmp.eq.s32.totalorder %s32, 0
      %p120 = por %p118, %p119
      %p121 = scmp.ne.s32.totalorder %s113, %s115
      %p122 = scmp.eq.s32.totalorder %s37, 7
      %p123 = por %p121, %p122
      %p124 = scmp.ne.s32.totalorder %s115, %s116
      %p125 = scmp.eq.s32.totalorder %s37, 0
      %p126 = por %p124, %p125
      %p127 = scmp.ne.s32.totalorder %s115, %s116
      %p128 = scmp.eq.s32.totalorder %s38, 7
      %p129 = por %p127, %p128
      %p131 = scmp.ne.s32.totalorder %s116, %s130
      %p132 = scmp.eq.s32.totalorder %s38, 0
      %p133 = por %p131, %p132
      %s135 = sadd.s32 %s134, 1
      %p138 = scmp.eq.s32.totalorder %s32, 7
      %p139 = scmp.ne.s32.totalorder %s134, %s136
      %p140 = scmp.eq.s32.totalorder %s32, 0
      %p141 = por %p139, %p140
      %p142 = scmp.ne.s32.totalorder %s134, %s136
      %p143 = scmp.eq.s32.totalorder %s37, 7
      %p144 = por %p142, %p143
      %p145 = scmp.ne.s32.totalorder %s136, %s137
      %p146 = scmp.eq.s32.totalorder %s37, 0
      %p147 = por %p145, %p146
      %p148 = scmp.ne.s32.totalorder %s136, %s137
      %p149 = scmp.eq.s32.totalorder %s38, 7
      %p150 = por %p148, %p149
      %p152 = scmp.ne.s32.totalorder %s137, %s151
      %p153 = scmp.eq.s32.totalorder %s38, 0
      %p154 = por %p152, %p153
      %s156 = sadd.s32 %s155, 1
      %p159 = scmp.eq.s32.totalorder %s32, 7
      %p160 = scmp.ne.s32.totalorder %s155, %s157
      %p161 = scmp.eq.s32.totalorder %s32, 0
      %p162 = por %p160, %p161
      %p163 = scmp.ne.s32.totalorder %s155, %s157
      %p164 = scmp.eq.s32.totalorder %s37, 7
      %p165 = por %p163, %p164
      %p166 = scmp.ne.s32.totalorder %s157, %s158
      %p167 = scmp.eq.s32.totalorder %s37, 0
      %p168 = por %p166, %p167
      %p169 = scmp.ne.s32.totalorder %s157, %s158
      %p170 = scmp.eq.s32.totalorder %s38, 7
      %p171 = por %p169, %p170
      %p173 = scmp.ne.s32.totalorder %s158, %s172
      %p174 = scmp.eq.s32.totalorder %s38, 0
      %p175 = por %p173, %p174
      %s177 = sadd.s32 %s176, 1
      %p180 = scmp.eq.s32.totalorder %s32, 7
      %p181 = scmp.ne.s32.totalorder %s176, %s178
      %p182 = scmp.eq.s32.totalorder %s32, 0
      %p183 = por %p181, %p182
      %p184 = scmp.ne.s32.totalorder %s176, %s178
      %p185 = scmp.eq.s32.totalorder %s37, 7
      %p186 = por %p184, %p185
      %p187 = scmp.ne.s32.totalorder %s178, %s179
      %p188 = scmp.eq.s32.totalorder %s37, 0
      %p189 = por %p187, %p188
      %p190 = scmp.ne.s32.totalorder %s178, %s179
      %p191 = scmp.eq.s32.totalorder %s38, 7
      %p192 = por %p190, %p191
      %p194 = scmp.ne.s32.totalorder %s179, %s193
      %p195 = scmp.eq.s32.totalorder %s38, 0
      %p196 = por %p194, %p195
      %s198 = sadd.s32 %s197, 1
      %p201 = scmp.eq.s32.totalorder %s32, 7
      %p202 = scmp.ne.s32.totalorder %s197, %s199
      %p203 = scmp.eq.s32.totalorder %s32, 0
      %p204 = por %p202, %p203
      %p205 = scmp.ne.s32.totalorder %s197, %s199
      %p206 = scmp.eq.s32.totalorder %s37, 7
      %p207 = por %p205, %p206
      %p208 = scmp.ne.s32.totalorder %s199, %s200
      %p209 = scmp.eq.s32.totalorder %s37, 0
      %p210 = por %p208, %p209
      %p211 = scmp.ne.s32.totalorder %s199, %s200
      %p212 = scmp.eq.s32.totalorder %s38, 7
      %p213 = por %p211, %p212
      %p215 = scmp.ne.s32.totalorder %s200, %s214
      %p216 = scmp.eq.s32.totalorder %s38, 0
      %p217 = por %p215, %p216
      %s219 = sadd.s32 %s218, 1
      %p222 = scmp.eq.s32.totalorder %s32, 7
      %p223 = scmp.ne.s32.totalorder %s218, %s220
      %p224 = scmp.eq.s32.totalorder %s32, 0
      %p225 = por %p223, %p224
      %p226 = scmp.ne.s32.totalorder %s218, %s220
      %p227 = scmp.eq.s32.totalorder %s37, 7
      %p228 = por %p226, %p227
      %p229 = scmp.ne.s32.totalorder %s220, %s221
      %p230 = scmp.eq.s32.totalorder %s37, 0
      %p231 = por %p229, %p230
      %p232 = scmp.ne.s32.totalorder %s220, %s221
      %p233 = scmp.eq.s32.totalorder %s38, 7
      %p234 = por %p232, %p233
      %p236 = scmp.ne.s32.totalorder %s221, %s235
      %p237 = scmp.eq.s32.totalorder %s38, 0
      %p238 = por %p236, %p237
      %s240 = sadd.s32 %s239, 1
      %p243 = scmp.eq.s32.totalorder %s32, 7
      %p244 = scmp.ne.s32.totalorder %s239, %s241
      %p245 = scmp.eq.s32.totalorder %s32, 0
      %p246 = por %p244, %p245
      %p247 = scmp.ne.s32.totalorder %s239, %s241
      %p248 = scmp.eq.s32.totalorder %s37, 7
      %p249 = por %p247, %p248
      %p250 = scmp.ne.s32.totalorder %s241, %s242
      %p251 = scmp.eq.s32.totalorder %s37, 0
      %p252 = por %p250, %p251
      %p253 = scmp.ne.s32.totalorder %s241, %s242
      %p254 = scmp.eq.s32.totalorder %s38, 7
      %p255 = por %p253, %p254
      %p257 = scmp.ne.s32.totalorder %s242, %s256
      %p258 = scmp.eq.s32.totalorder %s38, 0
      %p259 = por %p257, %p258
      %s261 = sadd.s32 %s260, 1
      %p264 = scmp.eq.s32.totalorder %s32, 7
      %p265 = scmp.ne.s32.totalorder %s260, %s262
      %p266 = scmp.eq.s32.totalorder %s32, 0
      %p267 = por %p265, %p266
      %p268 = scmp.ne.s32.totalorder %s260, %s262
      %p269 = scmp.eq.s32.totalorder %s37, 7
      %p270 = por %p268, %p269
      %p271 = scmp.ne.s32.totalorder %s262, %s263
      %p272 = scmp.eq.s32.totalorder %s37, 0
      %p273 = por %p271, %p272
      %p274 = scmp.ne.s32.totalorder %s262, %s263
      %p275 = scmp.eq.s32.totalorder %s38, 7
      %p276 = por %p274, %p275
      %p278 = scmp.ne.s32.totalorder %s263, %s277
      %p279 = scmp.eq.s32.totalorder %s38, 0
      %p280 = por %p278, %p279
      %s282 = sadd.s32 %s281, 1
      %p285 = scmp.eq.s32.totalorder %s32, 7
      %p286 = scmp.ne.s32.totalorder %s281, %s283
      %p287 = scmp.eq.s32.totalorder %s32, 0
      %p288 = por %p286, %p287
      %p289 = scmp.ne.s32.totalorder %s281, %s283
      %p290 = scmp.eq.s32.totalorder %s37, 7
      %p291 = por %p289, %p290
      %p292 = scmp.ne.s32.totalorder %s283, %s284
      %p293 = scmp.eq.s32.totalorder %s37, 0
      %p294 = por %p292, %p293
      %p295 = scmp.ne.s32.totalorder %s283, %s284
      %p296 = scmp.eq.s32.totalorder %s38, 7
      %p297 = por %p295, %p296
      %p299 = scmp.ne.s32.totalorder %s284, %s298
      %p300 = scmp.eq.s32.totalorder %s38, 0
      %p301 = por %p299, %p300
      %s303 = sadd.s32 %s302, 1
      %p306 = scmp.eq.s32.totalorder %s32, 7
      %p307 = scmp.ne.s32.totalorder %s302, %s304
      %p308 = scmp.eq.s32.totalorder %s32, 0
      %p309 = por %p307, %p308
      %p310 = scmp.ne.s32.totalorder %s302, %s304
      %p311 = scmp.eq.s32.totalorder %s37, 7
      %p312 = por %p310, %p311
      %p313 = scmp.ne.s32.totalorder %s304, %s305
      %p314 = scmp.eq.s32.totalorder %s37, 0
      %p315 = por %p313, %p314
      %p316 = scmp.ne.s32.totalorder %s304, %s305
      %p317 = scmp.eq.s32.totalorder %s38, 7
      %p318 = por %p316, %p317
      %p320 = scmp.ne.s32.totalorder %s305, %s319
      %p321 = scmp.eq.s32.totalorder %s38, 0
      %p322 = por %p320, %p321
      %s324 = sadd.s32 %s323, 1
      %p327 = scmp.eq.s32.totalorder %s32, 7
      %p328 = scmp.ne.s32.totalorder %s323, %s325
      %p329 = scmp.eq.s32.totalorder %s32, 0
      %p330 = por %p328, %p329
      %p331 = scmp.ne.s32.totalorder %s323, %s325
      %p332 = scmp.eq.s32.totalorder %s37, 7
      %p333 = por %p331, %p332
      %p334 = scmp.ne.s32.totalorder %s325, %s326
      %p335 = scmp.eq.s32.totalorder %s37, 0
      %p336 = por %p334, %p335
      %p337 = scmp.ne.s32.totalorder %s325, %s326
      %p338 = scmp.eq.s32.totalorder %s38, 7
      %p339 = por %p337, %p338
      %p341 = scmp.ne.s32.totalorder %s326, %s340
      %p342 = scmp.eq.s32.totalorder %s38, 0
      %p343 = por %p341, %p342
      %s345 = sadd.s32 %s344, 1
      %p348 = scmp.eq.s32.totalorder %s32, 7
      %p349 = scmp.ne.s32.totalorder %s344, %s346
      %p350 = scmp.eq.s32.totalorder %s32, 0
      %p351 = por %p349, %p350
      %p352 = scmp.ne.s32.totalorder %s344, %s346
      %p353 = scmp.eq.s32.totalorder %s37, 7
      %p354 = por %p352, %p353
      %p355 = scmp.ne.s32.totalorder %s346, %s347
      %p356 = scmp.eq.s32.totalorder %s37, 0
      %p357 = por %p355, %p356
      %p358 = scmp.ne.s32.totalorder %s346, %s347
      %p359 = scmp.eq.s32.totalorder %s38, 7
      %p360 = por %p358, %p359
      %p362 = scmp.ne.s32.totalorder %s347, %s361
      %p363 = scmp.eq.s32.totalorder %s38, 0
      %p364 = por %p362, %p363
      %s366 = sadd.s32 %s365, 1
      %p369 = scmp.eq.s32.totalorder %s32, 7
      %p370 = scmp.ne.s32.totalorder %s365, %s367
      %p371 = scmp.eq.s32.totalorder %s32, 0
      %p372 = por %p370, %p371
      %p373 = scmp.ne.s32.totalorder %s365, %s367
      %p374 = scmp.eq.s32.totalorder %s37, 7
      %p375 = por %p373, %p374
      %p376 = scmp.ne.s32.totalorder %s367, %s368
      %p377 = scmp.eq.s32.totalorder %s37, 0
      %p378 = por %p376, %p377
      %p379 = scmp.ne.s32.totalorder %s367, %s368
      %p380 = scmp.eq.s32.totalorder %s38, 7
      %p381 = por %p379, %p380
      %p383 = scmp.ne.s32.totalorder %s368, %s382
      %p384 = scmp.eq.s32.totalorder %s38, 0
      %p385 = por %p383, %p384
      %s387 = sadd.s32 %s386, 1
      %p390 = scmp.eq.s32.totalorder %s32, 7
      %p391 = scmp.ne.s32.totalorder %s386, %s388
      %p392 = scmp.eq.s32.totalorder %s32, 0
      %p393 = por %p391, %p392
      %p394 = scmp.ne.s32.totalorder %s386, %s388
      %p395 = scmp.eq.s32.totalorder %s37, 7
      %p396 = por %p394, %p395
      %p397 = scmp.ne.s32.totalorder %s388, %s389
      %p398 = scmp.eq.s32.totalorder %s37, 0
      %p399 = por %p397, %p398
      %p400 = scmp.ne.s32.totalorder %s388, %s389
      %p401 = scmp.eq.s32.totalorder %s38, 7
      %p402 = por %p400, %p401
      %p404 = scmp.ne.s32.totalorder %s389, %s403
      %p405 = scmp.eq.s32.totalorder %s38, 0
      %p406 = por %p404, %p405
      %s408 = sadd.s32 %s407, 1
      %p411 = scmp.eq.s32.totalorder %s32, 7
      %p412 = scmp.ne.s32.totalorder %s407, %s409
      %p413 = scmp.eq.s32.totalorder %s32, 0
      %p414 = por %p412, %p413
      %p415 = scmp.ne.s32.totalorder %s407, %s409
      %p416 = scmp.eq.s32.totalorder %s37, 7
      %p417 = por %p415, %p416
      %p418 = scmp.ne.s32.totalorder %s409, %s410
      %p419 = scmp.eq.s32.totalorder %s37, 0
      %p420 = por %p418, %p419
      %p421 = scmp.ne.s32.totalorder %s409, %s410
      %p422 = scmp.eq.s32.totalorder %s38, 7
      %p423 = por %p421, %p422
      %p425 = scmp.ne.s32.totalorder %s410, %s424
      %p426 = scmp.eq.s32.totalorder %s38, 0
      %p427 = por %p425, %p426
      %s429 = sadd.s32 %s428, 1
      %p432 = scmp.eq.s32.totalorder %s32, 7
      %p433 = scmp.ne.s32.totalorder %s428, %s430
      %p434 = scmp.eq.s32.totalorder %s32, 0
      %p435 = por %p433, %p434
      %p436 = scmp.ne.s32.totalorder %s428, %s430
      %p437 = scmp.eq.s32.totalorder %s37, 7
      %p438 = por %p436, %p437
      %p439 = scmp.ne.s32.totalorder %s430, %s431
      %p440 = scmp.eq.s32.totalorder %s37, 0
      %p441 = por %p439, %p440
      %p442 = scmp.ne.s32.totalorder %s430, %s431
      %p443 = scmp.eq.s32.totalorder %s38, 7
      %p444 = por %p442, %p443
      %p446 = scmp.ne.s32.totalorder %s431, %s445
      %p447 = scmp.eq.s32.totalorder %s38, 0
      %p448 = por %p446, %p447
      %s449 = ssub.s32 %s32, %s39
      %p450 = scmp.eq.s32.totalorder %s449, 0
      %s452 = sadd.s32 %s451, 1
      %s453 = scalar_select %p450, %s451, %s452
      %p456 = pneg %p450
      %p457 = scmp.eq.s32.totalorder %s32, 7
      %p458 = por %p456, %p457
      %p459 = scmp.ne.s32.totalorder %s451, %s454
      %p460 = scmp.eq.s32.totalorder %s32, 0
      %p461 = por %p459, %p460
      %p462 = scmp.ne.s32.totalorder %s451, %s454
      %p463 = scmp.eq.s32.totalorder %s37, 7
      %p464 = por %p462, %p463
      %p465 = scmp.ne.s32.totalorder %s454, %s455
      %p466 = scmp.eq.s32.totalorder %s37, 0
      %p467 = por %p465, %p466
      %p468 = scmp.ne.s32.totalorder %s454, %s455
      %p469 = scmp.eq.s32.totalorder %s38, 7
      %p470 = por %p468, %p469
      %p472 = scmp.ne.s32.totalorder %s455, %s471
      %p473 = scmp.eq.s32.totalorder %s38, 0
      %p474 = por %p472, %p473
      %s476 = sadd.s32 %s475, 1
      %p479 = scmp.eq.s32.totalorder %s32, 7
      %p480 = scmp.ne.s32.totalorder %s475, %s477
      %p481 = scmp.eq.s32.totalorder %s32, 0
      %p482 = por %p480, %p481
      %p483 = scmp.ne.s32.totalorder %s475, %s477
      %p484 = scmp.eq.s32.totalorder %s37, 7
      %p485 = por %p483, %p484
      %p486 = scmp.ne.s32.totalorder %s477, %s478
      %p487 = scmp.eq.s32.totalorder %s37, 0
      %p488 = por %p486, %p487
      %p489 = scmp.ne.s32.totalorder %s477, %s478
      %p490 = scmp.eq.s32.totalorder %s38, 7
      %p491 = por %p489, %p490
      %p493 = scmp.ne.s32.totalorder %s478, %s492
      %p494 = scmp.eq.s32.totalorder %s38, 0
      %p495 = por %p493, %p494
      %s497 = sadd.s32 %s496, 1
      %p500 = scmp.eq.s32.totalorder %s32, 7
      %p501 = scmp.ne.s32.totalorder %s496, %s498
      %p502 = scmp.eq.s32.totalorder %s32, 0
      %p503 = por %p501, %p502
      %p504 = scmp.ne.s32.totalorder %s496, %s498
      %p505 = scmp.eq.s32.totalorder %s37, 7
      %p506 = por %p504, %p505
      %p507 = scmp.ne.s32.totalorder %s498, %s499
      %p508 = scmp.eq.s32.totalorder %s37, 0
      %p509 = por %p507, %p508
      %p510 = scmp.ne.s32.totalorder %s498, %s499
      %p511 = scmp.eq.s32.totalorder %s38, 7
      %p512 = por %p510, %p511
      %p514 = scmp.ne.s32.totalorder %s499, %s513
      %p515 = scmp.eq.s32.totalorder %s38, 0
      %p516 = por %p514, %p515
      %p517 = scmp.le.s32.totalorder 1, %s32
      %p518 = scmp.lt.s32.totalorder %s32, 9
      %p519 = pnand %p517, %p518
      %p520 = pneg %p519
      // Predicated region
      $region9: #{policy_rollout.1} parent=5 // pred_check
        _
      $region10: #{policy_rollout.1} parent=5 // pred_check_branch
        %522 = sbr.rel (%p519) target = $region12
      $region11: #{policy_rollout.1} parent=5 // pred_region
        %s523 = ssub.s32 %s32, 1
        // Predicated region
        $region13: #{policy_rollout.1} parent=11 // pred_check
          %p524 = pneg %p105
        $region14: #{policy_rollout.1} parent=11 // pred_check_branch
          %526 = sbr.rel (%p524) target = $region16
        $region15: #{policy_rollout.1} parent=11 // pred_region
          _
        $region16: #{policy_rollout.1} parent=11 // pred_fallthru
          _
        // Predicated region
        $region17: #{policy_rollout.1} parent=11 // pred_check
          %p527 = pneg %p126
        $region18: #{policy_rollout.1} parent=11 // pred_check_branch
          %529 = sbr.rel (%p527) target = $region20
        $region19: #{policy_rollout.1} parent=11 // pred_region
          _
        $region20: #{policy_rollout.1} parent=11 // pred_fallthru
          _
        // Predicated region
        $region21: #{policy_rollout.1} parent=11 // pred_check
          %p530 = pneg %p147
        $region22: #{policy_rollout.1} parent=11 // pred_check_branch
          %532 = sbr.rel (%p530) target = $region24
        $region23: #{policy_rollout.1} parent=11 // pred_region
          _
        $region24: #{policy_rollout.1} parent=11 // pred_fallthru
          _
        // Predicated region
        $region25: #{policy_rollout.1} parent=11 // pred_check
          %p533 = pneg %p168
        $region26: #{policy_rollout.1} parent=11 // pred_check_branch
          %535 = sbr.rel (%p533) target = $region28
        $region27: #{policy_rollout.1} parent=11 // pred_region
          _
        $region28: #{policy_rollout.1} parent=11 // pred_fallthru
          _
        // Predicated region
        $region29: #{policy_rollout.1} parent=11 // pred_check
          %p536 = pneg %p189
        $region30: #{policy_rollout.1} parent=11 // pred_check_branch
          %538 = sbr.rel (%p536) target = $region32
        $region31: #{policy_rollout.1} parent=11 // pred_region
          _
        $region32: #{policy_rollout.1} parent=11 // pred_fallthru
          _
        // Predicated region
        $region33: #{policy_rollout.1} parent=11 // pred_check
          %p539 = pneg %p210
        $region34: #{policy_rollout.1} parent=11 // pred_check_branch
          %541 = sbr.rel (%p539) target = $region36
        $region35: #{policy_rollout.1} parent=11 // pred_region
          _
        $region36: #{policy_rollout.1} parent=11 // pred_fallthru
          _
        // Predicated region
        $region37: #{policy_rollout.1} parent=11 // pred_check
          %p542 = pneg %p231
        $region38: #{policy_rollout.1} parent=11 // pred_check_branch
          %544 = sbr.rel (%p542) target = $region40
        $region39: #{policy_rollout.1} parent=11 // pred_region
          _
        $region40: #{policy_rollout.1} parent=11 // pred_fallthru
          _
        // Predicated region
        $region41: #{policy_rollout.1} parent=11 // pred_check
          %p545 = pneg %p252
        $region42: #{policy_rollout.1} parent=11 // pred_check_branch
          %547 = sbr.rel (%p545) target = $region44
        $region43: #{policy_rollout.1} parent=11 // pred_region
          _
        $region44: #{policy_rollout.1} parent=11 // pred_fallthru
          _
        // Predicated region
        $region45: #{policy_rollout.1} parent=11 // pred_check
          %p548 = pneg %p273
        $region46: #{policy_rollout.1} parent=11 // pred_check_branch
          %550 = sbr.rel (%p548) target = $region48
        $region47: #{policy_rollout.1} parent=11 // pred_region
          _
        $region48: #{policy_rollout.1} parent=11 // pred_fallthru
          _
        // Predicated region
        $region49: #{policy_rollout.1} parent=11 // pred_check
          %p551 = pneg %p294
        $region50: #{policy_rollout.1} parent=11 // pred_check_branch
          %553 = sbr.rel (%p551) target = $region52
        $region51: #{policy_rollout.1} parent=11 // pred_region
          _
        $region52: #{policy_rollout.1} parent=11 // pred_fallthru
          _
        // Predicated region
        $region53: #{policy_rollout.1} parent=11 // pred_check
          %p554 = pneg %p315
        $region54: #{policy_rollout.1} parent=11 // pred_check_branch
          %556 = sbr.rel (%p554) target = $region56
        $region55: #{policy_rollout.1} parent=11 // pred_region
          _
        $region56: #{policy_rollout.1} parent=11 // pred_fallthru
          _
        // Predicated region
        $region57: #{policy_rollout.1} parent=11 // pred_check
          %p557 = pneg %p336
        $region58: #{policy_rollout.1} parent=11 // pred_check_branch
          %559 = sbr.rel (%p557) target = $region60
        $region59: #{policy_rollout.1} parent=11 // pred_region
          _
        $region60: #{policy_rollout.1} parent=11 // pred_fallthru
          _
        // Predicated region
        $region61: #{policy_rollout.1} parent=11 // pred_check
          %p560 = pneg %p357
        $region62: #{policy_rollout.1} parent=11 // pred_check_branch
          %562 = sbr.rel (%p560) target = $region64
        $region63: #{policy_rollout.1} parent=11 // pred_region
          _
        $region64: #{policy_rollout.1} parent=11 // pred_fallthru
          _
        // Predicated region
        $region65: #{policy_rollout.1} parent=11 // pred_check
          %p563 = pneg %p378
        $region66: #{policy_rollout.1} parent=11 // pred_check_branch
          %565 = sbr.rel (%p563) target = $region68
        $region67: #{policy_rollout.1} parent=11 // pred_region
          _
        $region68: #{policy_rollout.1} parent=11 // pred_fallthru
          _
        // Predicated region
        $region69: #{policy_rollout.1} parent=11 // pred_check
          %p566 = pneg %p399
        $region70: #{policy_rollout.1} parent=11 // pred_check_branch
          %568 = sbr.rel (%p566) target = $region72
        $region71: #{policy_rollout.1} parent=11 // pred_region
          _
        $region72: #{policy_rollout.1} parent=11 // pred_fallthru
          _
        // Predicated region
        $region73: #{policy_rollout.1} parent=11 // pred_check
          %p569 = pneg %p420
        $region74: #{policy_rollout.1} parent=11 // pred_check_branch
          %571 = sbr.rel (%p569) target = $region76
        $region75: #{policy_rollout.1} parent=11 // pred_region
          _
        $region76: #{policy_rollout.1} parent=11 // pred_fallthru
          _
        // Predicated region
        $region77: #{policy_rollout.1} parent=11 // pred_check
          %p572 = pneg %p441
        $region78: #{policy_rollout.1} parent=11 // pred_check_branch
          %574 = sbr.rel (%p572) target = $region80
        $region79: #{policy_rollout.1} parent=11 // pred_region
          _
        $region80: #{policy_rollout.1} parent=11 // pred_fallthru
          _
      $region12: #{policy_rollout.1} parent=5 // pred_fallthru
        _
      %p575 = scmp.lt.s32.totalorder %s32, 8
      // Predicated region
      $region81: #{policy_rollout.1} parent=5 // pred_check
        %p576 = pneg %p575
      $region82: #{policy_rollout.1} parent=5 // pred_check_branch
        %578 = sbr.rel (%p576) target = $region84
      $region83: #{policy_rollout.1} parent=5 // pred_region
        // Predicated region
        $region85: #{policy_rollout.1} parent=83 // pred_check
          %p579 = pneg %p52
        $region86: #{policy_rollout.1} parent=83 // pred_check_branch
          %581 = sbr.rel (%p579) target = $region88
        $region87: #{policy_rollout.1} parent=83 // pred_region
          %p582 = scmp.lt.s32.totalorder %s32, 7
          %s583 = scalar_select %p582, %s32, 7
          %s584 = smul.addr %s583, 8
          %s585 = smul.addr %s584, 4
          %s586 = scalar_lea.vmem %s0, %s585
        $region88: #{policy_rollout.1} parent=83 // pred_fallthru
          _
        // Predicated region
        $region89: #{policy_rollout.1} parent=83 // pred_check
          %p587 = pneg %p78
        $region90: #{policy_rollout.1} parent=83 // pred_check_branch
          %589 = sbr.rel (%p587) target = $region92
        $region91: #{policy_rollout.1} parent=83 // pred_region
          %p590 = scmp.lt.s32.totalorder %s32, 7
          %s591 = scalar_select %p590, %s32, 7
          %s592 = smul.addr %s591, 8
          %s593 = smul.addr %s592, 4
          %s594 = scalar_lea.vmem %s1, %s593
        $region92: #{policy_rollout.1} parent=83 // pred_fallthru
          _
      $region84: #{policy_rollout.1} parent=5 // pred_fallthru
        _
      %p595 = scmp.le.s32.totalorder 1, %s32
      %p596 = scmp.lt.s32.totalorder %s32, 9
      %p597 = pnand %p595, %p596
      %p598 = pneg %p597
      // Predicated region
      $region93: #{policy_rollout.1} parent=5 // pred_check
        _
      $region94: #{policy_rollout.1} parent=5 // pred_check_branch
        %600 = sbr.rel (%p597) target = $region96
      $region95: #{policy_rollout.1} parent=5 // pred_region
        %s601 = ssub.s32 %s32, 1
        %p602 = scmp.lt.s32.totalorder %s37, 7
        %s603 = scalar_select %p602, %s37, 7
        %s604 = smul.addr %s603, 8
        %s605 = smul.addr %s604, 4
        %s606 = scalar_lea.vmem %s0, %s605
        %p607 = pneg %p58
        %p608 = pneg %p55
        %p609 = scmp.lt.s32.totalorder %s37, 7
        %s610 = scalar_select %p609, %s37, 7
        %s611 = smul.addr %s610, 8
        %s612 = smul.addr %s611, 4
        %s613 = scalar_lea.vmem %s1, %s612
        %p614 = pneg %p84
        %p615 = pneg %p81
        %p616 = pneg %p105
        %p617 = pneg %p102
        %p618 = pneg %p126
        %p619 = pneg %p123
        %p620 = pneg %p147
        %p621 = pneg %p144
        %p622 = pneg %p168
        %p623 = pneg %p165
        %p624 = pneg %p189
        %p625 = pneg %p186
        %p626 = pneg %p210
        %p627 = pneg %p207
        %p628 = pneg %p231
        %p629 = pneg %p228
        %p630 = pneg %p252
        %p631 = pneg %p249
        %p632 = pneg %p273
        %p633 = pneg %p270
        %p634 = pneg %p294
        %p635 = pneg %p291
        %p636 = pneg %p315
        %p637 = pneg %p312
        %p638 = pneg %p336
        %p639 = pneg %p333
        %p640 = pneg %p357
        %p641 = pneg %p354
        %p642 = pneg %p378
        %p643 = pneg %p375
        %p644 = pneg %p399
        %p645 = pneg %p396
        %p646 = pneg %p420
        %p647 = pneg %p417
        %p648 = pneg %p441
        %p649 = pneg %p438
        %p650 = pneg %p467
        %p651 = pneg %p464
        %s652 = sand.u32 %s454, 1
        %s653 = scalar_lea.sflag [#allocation5], %s652
        %s654 = sand.u32 %s454, 1
        %s655 = smul.addr %s654, 8
        %s656 = scalar_lea.vmem [#allocation4], %s655
        %p657 = pneg %p488
        %p658 = pneg %p485
        %p659 = pneg %p509
        %p660 = pneg %p506
        %p661 = scmp.lt.s32.totalorder %s37, 7
        %s662 = scalar_select %p661, %s37, 7
        %s663 = smul.addr %s662, 8
        %s664 = smul.addr %s663, 4
        %s665 = scalar_lea.vmem %s0, %s664
        %p666 = scmp.lt.s32.totalorder %s37, 7
        %s667 = scalar_select %p666, %s37, 7
        %s668 = smul.addr %s667, 8
        %s669 = smul.addr %s668, 4
        %s670 = scalar_lea.vmem %s1, %s669
        %p672 = scmp.eq.s32.totalorder %s37, 0
        // Predicated region
        $region97: #{policy_rollout.1} parent=95 // pred_check
          %p673 = pneg %p672
        $region98: #{policy_rollout.1} parent=95 // pred_check_branch
          %675 = sbr.rel (%p673) target = $region100
        $region99: #{policy_rollout.1} parent=95 // pred_region
          %v676 = vld [vmem:[%s2] sm:$0xff]
          %677 = vst [vmem:[#allocation2] sm:$0xff] %v676
          %v678 = vld [vmem:[%s3] sm:$0xff]
          %679 = vst [vmem:[#allocation3] sm:$0xff] %v678
        $region100: #{policy_rollout.1} parent=95 // pred_fallthru
          _
        %v680 = vld [vmem:[%s665] sm:$0xf]
        %v681 = vld [vmem:[%s665 + $0x4] sm:$0xf]
        %v682 = vld [vmem:[%s665 + $0x8] sm:$0xf]
        %v683 = vld [vmem:[%s665 + $0xc] sm:$0xf]
        %v684 = vld [vmem:[%s665 + $0x10] sm:$0xf]
        %v685 = vld [vmem:[%s665 + $0x14] sm:$0xf]
        %v686 = vld [vmem:[%s665 + $0x18] sm:$0xf]
        %v687 = vld [vmem:[%s665 + $0x1c] sm:$0xf]
        %v688 = vld [vmem:[%s5] sm:$0xf]
        %v689 = vld [vmem:[%s5 + $0x4] sm:$0xf]
        %v690 = vld [vmem:[%s6] sm:$0x1]
        %v692 = vperm.slane %v690, 0
        %v702 = vunpack.c.l.b16 %v680
        %v703 = vunpack.c.l.b16 %v681
        %v704 = vunpack.c.l.b16 %v682
        %v705 = vunpack.c.l.b16 %v683
        %v706 = vunpack.c.l.b16 %v684
        %v707 = vunpack.c.l.b16 %v685
        %v708 = vunpack.c.l.b16 %v686
        %v709 = vunpack.c.l.b16 %v687
        %v710 = vpack.c.b16 %v703, %v702
        %v711 = vpack.c.b16 %v705, %v704
        %v712 = vpack.c.b16 %v707, %v706
        %v713 = vpack.c.b16 %v709, %v708
        %v716 = vunpack.c.l.b16 %v688
        %v717 = vunpack.c.l.b16 %v689
        %v718 = vpack.c.b16 %v717, %v716
        %vm720 = vcmask 130048
        %v722 = vsel %vm720, %v710, 0
        %v725 = vsel %vm720, %v711, 0
        %v728 = vsel %vm720, %v712, 0
        %v731 = vsel %vm720, %v713, 0
        %733 = vmatpush.bf16.msra.mxu0 0
        %734 = vmatpush.bf16.msra.mxu0 0
        %735 = vmatpush.bf16.msra.mxu0 0
        %736 = vmatpush.bf16.msra.mxu0 0
        %737 = vmatpush.bf16.msra.mxu0 0
        %738 = vmatpush.bf16.msra.mxu0 0
        %739 = vmatpush.bf16.msra.mxu0 0
        %740 = vmatpush.bf16.msra.mxu0 %v718
        %741 = vmatmul.bf16.gmra.mxu0 %v722
        %v742 = vpop.f32.mrf.mxu0
        %v743 = vadd.f32 %v692, %v742
        %v744 = vpop.f32.mrf.mxu0
        %v745 = vadd.f32 %v692, %v744
        %746 = vmatmul.bf16.gmra.mxu0 %v725
        %v747 = vpop.f32.mrf.mxu0
        %v748 = vadd.f32 %v692, %v747
        %v749 = vpop.f32.mrf.mxu0
        %v750 = vadd.f32 %v692, %v749
        %751 = vmatmul.bf16.gmra.mxu0 %v728
        %v752 = vpop.f32.mrf.mxu0
        %v753 = vadd.f32 %v692, %v752
        %v754 = vpop.f32.mrf.mxu0
        %v755 = vadd.f32 %v692, %v754
        %756 = vmatmul.bf16.gmra.mxu0 %v731
        %v757 = vpop.f32.mrf.mxu0
        %v758 = vadd.f32 %v692, %v757
        %v759 = vpop.f32.mrf.mxu0
        %v760 = vadd.f32 %v692, %v759
        %761 = vdwg.mxu0
        %v762 = vmax.f32 %v743, 0.0
        %v763 = vmax.f32 %v745, 0.0
        %v764 = vmax.f32 %v748, 0.0
        %v765 = vmax.f32 %v750, 0.0
        %v766 = vmax.f32 %v753, 0.0
        %v767 = vmax.f32 %v755, 0.0
        %v768 = vmax.f32 %v758, 0.0
        %v769 = vmax.f32 %v760, 0.0
        %v770 = vld [vmem:[%s4] sm:$0xf]
        %v771 = vpack.c.bf16 %v763, %v762
        %v772 = vpack.c.bf16 %v765, %v764
        %v773 = vpack.c.bf16 %v767, %v766
        %v774 = vpack.c.bf16 %v769, %v768
        %vm775 = vcmask 523264
        %v777 = vsel %vm775, %v770, 0
        %779 = vmatpush.bf16.msra.mxu0 0
        %780 = vmatpush.bf16.msra.mxu0 0
        %781 = vmatpush.bf16.msra.mxu0 0
        %782 = vmatpush.bf16.msra.mxu0 0
        %783 = vmatpush.bf16.msra.mxu0 %v774
        %784 = vmatpush.bf16.msra.mxu0 %v773
        %785 = vmatpush.bf16.msra.mxu0 %v772
        %786 = vmatpush.bf16.msra.mxu0 %v771
        %787 = vmatmul.bf16.gmra.mxu0 %v777
        %v788 = vpop.f32.mrf.mxu0
        %v789 = vadd.f32 0.0, %v788
        %v790 = vpop.f32.mrf.mxu0
        %791 = vdwg.mxu0
        %v792 = vld [vmem:[%s670] sm:$0xff]
        %v793 = vld [vmem:[%s670 + $0x8] sm:$0xff]
        %v794 = vld [vmem:[%s670 + $0x10] sm:$0xff]
        %v795 = vld [vmem:[%s670 + $0x18] sm:$0xff]
        %v796 = vld [vmem:[%s7] sm:$0xf]
        %v797 = vld [vmem:[%s7 + $0x4] sm:$0xf]
        %v798 = vld [vmem:[%s7 + $0x8] sm:$0xf]
        %v799 = vld [vmem:[%s7 + $0xc] sm:$0xf]
        %v800 = vld [vmem:[%s7 + $0x10] sm:$0xf]
        %v801 = vld [vmem:[%s7 + $0x14] sm:$0xf]
        %v802 = vld [vmem:[%s7 + $0x18] sm:$0xf]
        %v803 = vld [vmem:[%s7 + $0x1c] sm:$0xf]
        %v804 = vld [vmem:[%s7 + $0x20] sm:$0xf]
        %v805 = vld [vmem:[%s7 + $0x24] sm:$0xf]
        %v806 = vld [vmem:[%s7 + $0x28] sm:$0xf]
        %v807 = vld [vmem:[%s7 + $0x2c] sm:$0xf]
        %v808 = vld [vmem:[%s7 + $0x30] sm:$0xf]
        %v809 = vld [vmem:[%s7 + $0x34] sm:$0xf]
        %v810 = vld [vmem:[%s7 + $0x38] sm:$0xf]
        %v811 = vld [vmem:[%s7 + $0x3c] sm:$0xf]
        %v812 = vld [vmem:[%s7 + $0x40] sm:$0xf]
        %v813 = vld [vmem:[%s7 + $0x44] sm:$0xf]
        %v814 = vld [vmem:[%s7 + $0x48] sm:$0xf]
        %v815 = vld [vmem:[%s7 + $0x4c] sm:$0xf]
        %v816 = vld [vmem:[%s7 + $0x50] sm:$0xf]
        %v817 = vld [vmem:[%s7 + $0x54] sm:$0xf]
        %v818 = vld [vmem:[%s7 + $0x58] sm:$0xf]
        %v819 = vld [vmem:[%s7 + $0x5c] sm:$0xf]
        %v820 = vld [vmem:[%s7 + $0x60] sm:$0xf]
        %v821 = vld [vmem:[%s7 + $0x64] sm:$0xf]
        %v822 = vld [vmem:[%s7 + $0x68] sm:$0xf]
        %v823 = vld [vmem:[%s7 + $0x6c] sm:$0xf]
        %v824 = vld [vmem:[%s7 + $0x70] sm:$0xf]
        %v825 = vld [vmem:[%s7 + $0x74] sm:$0xf]
        %v826 = vld [vmem:[%s7 + $0x78] sm:$0xf]
        %v827 = vld [vmem:[%s7 + $0x7c] sm:$0xf]
        %v828 = vld [vmem:[%s7 + $0x80] sm:$0xf]
        %v829 = vld [vmem:[%s7 + $0x84] sm:$0xf]
        %v830 = vld [vmem:[%s7 + $0x88] sm:$0xf]
        %v831 = vld [vmem:[%s7 + $0x8c] sm:$0xf]
        %v832 = vld [vmem:[%s7 + $0x90] sm:$0xf]
        %v833 = vld [vmem:[%s7 + $0x94] sm:$0xf]
        %v834 = vld [vmem:[%s7 + $0x98] sm:$0xf]
        %v835 = vld [vmem:[%s7 + $0x9c] sm:$0xf]
        %v836 = vld [vmem:[%s7 + $0xa0] sm:$0xf]
        %v837 = vld [vmem:[%s7 + $0xa4] sm:$0xf]
        %v838 = vld [vmem:[%s7 + $0xa8] sm:$0xf]
        %v839 = vld [vmem:[%s7 + $0xac] sm:$0xf]
        %v840 = vld [vmem:[%s7 + $0xb0] sm:$0xf]
        %v841 = vld [vmem:[%s7 + $0xb4] sm:$0xf]
        %v842 = vld [vmem:[%s7 + $0xb8] sm:$0xf]
        %v843 = vld [vmem:[%s7 + $0xbc] sm:$0xf]
        %v844 = vld [vmem:[%s7 + $0xc0] sm:$0xf]
        %v845 = vld [vmem:[%s7 + $0xc4] sm:$0xf]
        %v846 = vld [vmem:[%s7 + $0xc8] sm:$0xf]
        %v847 = vld [vmem:[%s7 + $0xcc] sm:$0xf]
        %v848 = vld [vmem:[%s7 + $0xd0] sm:$0xf]
        %v849 = vld [vmem:[%s7 + $0xd4] sm:$0xf]
        %v850 = vld [vmem:[%s7 + $0xd8] sm:$0xf]
        %v851 = vld [vmem:[%s7 + $0xdc] sm:$0xf]
        %v852 = vld [vmem:[%s7 + $0xe0] sm:$0xf]
        %v853 = vld [vmem:[%s7 + $0xe4] sm:$0xf]
        %v854 = vld [vmem:[%s7 + $0xe8] sm:$0xf]
        %v855 = vld [vmem:[%s7 + $0xec] sm:$0xf]
        %v856 = vld [vmem:[%s7 + $0xf0] sm:$0xf]
        %v857 = vld [vmem:[%s7 + $0xf4] sm:$0xf]
        %v858 = vld [vmem:[%s7 + $0xf8] sm:$0xf]
        %v859 = vld [vmem:[%s7 + $0xfc] sm:$0xf]
        %v860 = vld [vmem:[%s7 + $0x100] sm:$0xf]
        %v861 = vld [vmem:[%s7 + $0x104] sm:$0xf]
        %v862 = vld [vmem:[%s7 + $0x108] sm:$0xf]
        %v863 = vld [vmem:[%s7 + $0x10c] sm:$0xf]
        %v864 = vld [vmem:[%s7 + $0x110] sm:$0xf]
        %v865 = vld [vmem:[%s7 + $0x114] sm:$0xf]
        %v866 = vld [vmem:[%s7 + $0x118] sm:$0xf]
        %v867 = vld [vmem:[%s7 + $0x11c] sm:$0xf]
        %v868 = vld [vmem:[%s7 + $0x120] sm:$0xf]
        %v869 = vld [vmem:[%s7 + $0x124] sm:$0xf]
        %v870 = vld [vmem:[%s7 + $0x128] sm:$0xf]
        %v871 = vld [vmem:[%s7 + $0x12c] sm:$0xf]
        %v872 = vld [vmem:[%s7 + $0x130] sm:$0xf]
        %v873 = vld [vmem:[%s7 + $0x134] sm:$0xf]
        %v874 = vld [vmem:[%s7 + $0x138] sm:$0xf]
        %v875 = vld [vmem:[%s7 + $0x13c] sm:$0xf]
        %v876 = vld [vmem:[%s7 + $0x140] sm:$0xf]
        %v877 = vld [vmem:[%s7 + $0x144] sm:$0xf]
        %v878 = vld [vmem:[%s7 + $0x148] sm:$0xf]
        %v879 = vld [vmem:[%s7 + $0x14c] sm:$0xf]
        %v880 = vld [vmem:[%s7 + $0x150] sm:$0xf]
        %v881 = vld [vmem:[%s7 + $0x154] sm:$0xf]
        %v882 = vld [vmem:[%s7 + $0x158] sm:$0xf]
        %v883 = vld [vmem:[%s7 + $0x15c] sm:$0xf]
        %v884 = vld [vmem:[%s7 + $0x160] sm:$0xf]
        %v885 = vld [vmem:[%s7 + $0x164] sm:$0xf]
        %v886 = vld [vmem:[%s7 + $0x168] sm:$0xf]
        %v887 = vld [vmem:[%s7 + $0x16c] sm:$0xf]
        %v888 = vld [vmem:[%s7 + $0x170] sm:$0xf]
        %v889 = vld [vmem:[%s7 + $0x174] sm:$0xf]
        %v890 = vld [vmem:[%s7 + $0x178] sm:$0xf]
        %v891 = vld [vmem:[%s7 + $0x17c] sm:$0xf]
        %v892 = vld [vmem:[%s7 + $0x180] sm:$0xf]
        %v893 = vld [vmem:[%s7 + $0x184] sm:$0xf]
        %v894 = vld [vmem:[%s7 + $0x188] sm:$0xf]
        %v895 = vld [vmem:[%s7 + $0x18c] sm:$0xf]
        %v896 = vld [vmem:[%s7 + $0x190] sm:$0xf]
        %v897 = vld [vmem:[%s7 + $0x194] sm:$0xf]
        %v898 = vld [vmem:[%s7 + $0x198] sm:$0xf]
        %v899 = vld [vmem:[%s7 + $0x19c] sm:$0xf]
        %v900 = vld [vmem:[%s7 + $0x1a0] sm:$0xf]
        %v901 = vld [vmem:[%s7 + $0x1a4] sm:$0xf]
        %v902 = vld [vmem:[%s7 + $0x1a8] sm:$0xf]
        %v903 = vld [vmem:[%s7 + $0x1ac] sm:$0xf]
        %v904 = vld [vmem:[%s7 + $0x1b0] sm:$0xf]
        %v905 = vld [vmem:[%s7 + $0x1b4] sm:$0xf]
        %v906 = vld [vmem:[%s7 + $0x1b8] sm:$0xf]
        %v907 = vld [vmem:[%s7 + $0x1bc] sm:$0xf]
        %v908 = vld [vmem:[%s7 + $0x1c0] sm:$0xf]
        %v909 = vld [vmem:[%s7 + $0x1c4] sm:$0xf]
        %v910 = vld [vmem:[%s7 + $0x1c8] sm:$0xf]
        %v911 = vld [vmem:[%s7 + $0x1cc] sm:$0xf]
        %v912 = vld [vmem:[%s7 + $0x1d0] sm:$0xf]
        %v913 = vld [vmem:[%s7 + $0x1d4] sm:$0xf]
        %v914 = vld [vmem:[%s7 + $0x1d8] sm:$0xf]
        %v915 = vld [vmem:[%s7 + $0x1dc] sm:$0xf]
        %v916 = vld [vmem:[%s7 + $0x1e0] sm:$0xf]
        %v917 = vld [vmem:[%s7 + $0x1e4] sm:$0xf]
        %v918 = vld [vmem:[%s7 + $0x1e8] sm:$0xf]
        %v919 = vld [vmem:[%s7 + $0x1ec] sm:$0xf]
        %v920 = vld [vmem:[%s7 + $0x1f0] sm:$0xf]
        %v921 = vld [vmem:[%s7 + $0x1f4] sm:$0xf]
        %v922 = vld [vmem:[%s7 + $0x1f8] sm:$0xf]
        %v923 = vld [vmem:[%s7 + $0x1fc] sm:$0xf]
        %v924 = vld [vmem:[%s8] sm:$0x1]
        %v926 = vperm.slane %v924, 0
        %v932 = vunpack.c.l.b16 %v792
        %v933 = vunpack.c.h.b16 %v792
        %v934 = vunpack.c.l.b16 %v793
        %v935 = vunpack.c.h.b16 %v793
        %v936 = vunpack.c.l.b16 %v794
        %v937 = vunpack.c.h.b16 %v794
        %v938 = vunpack.c.l.b16 %v795
        %v939 = vunpack.c.h.b16 %v795
        %v940 = vpack.c.b16 %v932, %v932
        %v941 = vpack.c.b16 %v933, %v933
        %v942 = vpack.c.b16 %v934, %v934
        %v943 = vpack.c.b16 %v935, %v935
        %v944 = vpack.c.b16 %v936, %v936
        %v945 = vpack.c.b16 %v937, %v937
        %v946 = vpack.c.b16 %v938, %v938
        %v947 = vpack.c.b16 %v939, %v939
        %v1084 = vunpack.c.l.b16 %v796
        %v1085 = vunpack.c.l.b16 %v797
        %v1086 = vunpack.c.l.b16 %v798
        %v1087 = vunpack.c.l.b16 %v799
        %v1088 = vunpack.c.l.b16 %v800
        %v1089 = vunpack.c.l.b16 %v801
        %v1090 = vunpack.c.l.b16 %v802
        %v1091 = vunpack.c.l.b16 %v803
        %v1092 = vunpack.c.l.b16 %v804
        %v1093 = vunpack.c.l.b16 %v805
        %v1094 = vunpack.c.l.b16 %v806
        %v1095 = vunpack.c.l.b16 %v807
        %v1096 = vunpack.c.l.b16 %v808
        %v1097 = vunpack.c.l.b16 %v809
        %v1098 = vunpack.c.l.b16 %v810
        %v1099 = vunpack.c.l.b16 %v811
        %v1100 = vunpack.c.l.b16 %v812
        %v1101 = vunpack.c.l.b16 %v813
        %v1102 = vunpack.c.l.b16 %v814
        %v1103 = vunpack.c.l.b16 %v815
        %v1104 = vunpack.c.l.b16 %v816
        %v1105 = vunpack.c.l.b16 %v817
        %v1106 = vunpack.c.l.b16 %v818
        %v1107 = vunpack.c.l.b16 %v819
        %v1108 = vunpack.c.l.b16 %v820
        %v1109 = vunpack.c.l.b16 %v821
        %v1110 = vunpack.c.l.b16 %v822
        %v1111 = vunpack.c.l.b16 %v823
        %v1112 = vunpack.c.l.b16 %v824
        %v1113 = vunpack.c.l.b16 %v825
        %v1114 = vunpack.c.l.b16 %v826
        %v1115 = vunpack.c.l.b16 %v827
        %v1116 = vunpack.c.l.b16 %v828
        %v1117 = vunpack.c.l.b16 %v829
        %v1118 = vunpack.c.l.b16 %v830
        %v1119 = vunpack.c.l.b16 %v831
        %v1120 = vunpack.c.l.b16 %v832
        %v1121 = vunpack.c.l.b16 %v833
        %v1122 = vunpack.c.l.b16 %v834
        %v1123 = vunpack.c.l.b16 %v835
        %v1124 = vunpack.c.l.b16 %v836
        %v1125 = vunpack.c.l.b16 %v837
        %v1126 = vunpack.c.l.b16 %v838
        %v1127 = vunpack.c.l.b16 %v839
        %v1128 = vunpack.c.l.b16 %v840
        %v1129 = vunpack.c.l.b16 %v841
        %v1130 = vunpack.c.l.b16 %v842
        %v1131 = vunpack.c.l.b16 %v843
        %v1132 = vunpack.c.l.b16 %v844
        %v1133 = vunpack.c.l.b16 %v845
        %v1134 = vunpack.c.l.b16 %v846
        %v1135 = vunpack.c.l.b16 %v847
        %v1136 = vunpack.c.l.b16 %v848
        %v1137 = vunpack.c.l.b16 %v849
        %v1138 = vunpack.c.l.b16 %v850
        %v1139 = vunpack.c.l.b16 %v851
        %v1140 = vunpack.c.l.b16 %v852
        %v1141 = vunpack.c.l.b16 %v853
        %v1142 = vunpack.c.l.b16 %v854
        %v1143 = vunpack.c.l.b16 %v855
        %v1144 = vunpack.c.l.b16 %v856
        %v1145 = vunpack.c.l.b16 %v857
        %v1146 = vunpack.c.l.b16 %v858
        %v1147 = vunpack.c.l.b16 %v859
        %v1148 = vunpack.c.l.b16 %v860
        %v1149 = vunpack.c.l.b16 %v861
        %v1150 = vunpack.c.l.b16 %v862
        %v1151 = vunpack.c.l.b16 %v863
        %v1152 = vunpack.c.l.b16 %v864
        %v1153 = vunpack.c.l.b16 %v865
        %v1154 = vunpack.c.l.b16 %v866
        %v1155 = vunpack.c.l.b16 %v867
        %v1156 = vunpack.c.l.b16 %v868
        %v1157 = vunpack.c.l.b16 %v869
        %v1158 = vunpack.c.l.b16 %v870
        %v1159 = vunpack.c.l.b16 %v871
        %v1160 = vunpack.c.l.b16 %v872
        %v1161 = vunpack.c.l.b16 %v873
        %v1162 = vunpack.c.l.b16 %v874
        %v1163 = vunpack.c.l.b16 %v875
        %v1164 = vunpack.c.l.b16 %v876
        %v1165 = vunpack.c.l.b16 %v877
        %v1166 = vunpack.c.l.b16 %v878
        %v1167 = vunpack.c.l.b16 %v879
        %v1168 = vunpack.c.l.b16 %v880
        %v1169 = vunpack.c.l.b16 %v881
        %v1170 = vunpack.c.l.b16 %v882
        %v1171 = vunpack.c.l.b16 %v883
        %v1172 = vunpack.c.l.b16 %v884
        %v1173 = vunpack.c.l.b16 %v885
        %v1174 = vunpack.c.l.b16 %v886
        %v1175 = vunpack.c.l.b16 %v887
        %v1176 = vunpack.c.l.b16 %v888
        %v1177 = vunpack.c.l.b16 %v889
        %v1178 = vunpack.c.l.b16 %v890
        %v1179 = vunpack.c.l.b16 %v891
        %v1180 = vunpack.c.l.b16 %v892
        %v1181 = vunpack.c.l.b16 %v893
        %v1182 = vunpack.c.l.b16 %v894
        %v1183 = vunpack.c.l.b16 %v895
        %v1184 = vunpack.c.l.b16 %v896
        %v1185 = vunpack.c.l.b16 %v897
        %v1186 = vunpack.c.l.b16 %v898
        %v1187 = vunpack.c.l.b16 %v899
        %v1188 = vunpack.c.l.b16 %v900
        %v1189 = vunpack.c.l.b16 %v901
        %v1190 = vunpack.c.l.b16 %v902
        %v1191 = vunpack.c.l.b16 %v903
        %v1192 = vunpack.c.l.b16 %v904
        %v1193 = vunpack.c.l.b16 %v905
        %v1194 = vunpack.c.l.b16 %v906
        %v1195 = vunpack.c.l.b16 %v907
        %v1196 = vunpack.c.l.b16 %v908
        %v1197 = vunpack.c.l.b16 %v909
        %v1198 = vunpack.c.l.b16 %v910
        %v1199 = vunpack.c.l.b16 %v911
        %v1200 = vunpack.c.l.b16 %v912
        %v1201 = vunpack.c.l.b16 %v913
        %v1202 = vunpack.c.l.b16 %v914
        %v1203 = vunpack.c.l.b16 %v915
        %v1204 = vunpack.c.l.b16 %v916
        %v1205 = vunpack.c.l.b16 %v917
        %v1206 = vunpack.c.l.b16 %v918
        %v1207 = vunpack.c.l.b16 %v919
        %v1208 = vunpack.c.l.b16 %v920
        %v1209 = vunpack.c.l.b16 %v921
        %v1210 = vunpack.c.l.b16 %v922
        %v1211 = vunpack.c.l.b16 %v923
        %v1212 = vpack.c.b16 %v1085, %v1084
        %v1213 = vpack.c.b16 %v1087, %v1086
        %v1214 = vpack.c.b16 %v1089, %v1088
        %v1215 = vpack.c.b16 %v1091, %v1090
        %v1216 = vpack.c.b16 %v1093, %v1092
        %v1217 = vpack.c.b16 %v1095, %v1094
        %v1218 = vpack.c.b16 %v1097, %v1096
        %v1219 = vpack.c.b16 %v1099, %v1098
        %v1220 = vpack.c.b16 %v1101, %v1100
        %v1221 = vpack.c.b16 %v1103, %v1102
        %v1222 = vpack.c.b16 %v1105, %v1104
        %v1223 = vpack.c.b16 %v1107, %v1106
        %v1224 = vpack.c.b16 %v1109, %v1108
        %v1225 = vpack.c.b16 %v1111, %v1110
        %v1226 = vpack.c.b16 %v1113, %v1112
        %v1227 = vpack.c.b16 %v1115, %v1114
        %v1228 = vpack.c.b16 %v1117, %v1116
        %v1229 = vpack.c.b16 %v1119, %v1118
        %v1230 = vpack.c.b16 %v1121, %v1120
        %v1231 = vpack.c.b16 %v1123, %v1122
        %v1232 = vpack.c.b16 %v1125, %v1124
        %v1233 = vpack.c.b16 %v1127, %v1126
        %v1234 = vpack.c.b16 %v1129, %v1128
        %v1235 = vpack.c.b16 %v1131, %v1130
        %v1236 = vpack.c.b16 %v1133, %v1132
        %v1237 = vpack.c.b16 %v1135, %v1134
        %v1238 = vpack.c.b16 %v1137, %v1136
        %v1239 = vpack.c.b16 %v1139, %v1138
        %v1240 = vpack.c.b16 %v1141, %v1140
        %v1241 = vpack.c.b16 %v1143, %v1142
        %v1242 = vpack.c.b16 %v1145, %v1144
        %v1243 = vpack.c.b16 %v1147, %v1146
        %v1244 = vpack.c.b16 %v1149, %v1148
        %v1245 = vpack.c.b16 %v1151, %v1150
        %v1246 = vpack.c.b16 %v1153, %v1152
        %v1247 = vpack.c.b16 %v1155, %v1154
        %v1248 = vpack.c.b16 %v1157, %v1156
        %v1249 = vpack.c.b16 %v1159, %v1158
        %v1250 = vpack.c.b16 %v1161, %v1160
        %v1251 = vpack.c.b16 %v1163, %v1162
        %v1252 = vpack.c.b16 %v1165, %v1164
        %v1253 = vpack.c.b16 %v1167, %v1166
        %v1254 = vpack.c.b16 %v1169, %v1168
        %v1255 = vpack.c.b16 %v1171, %v1170
        %v1256 = vpack.c.b16 %v1173, %v1172
        %v1257 = vpack.c.b16 %v1175, %v1174
        %v1258 = vpack.c.b16 %v1177, %v1176
        %v1259 = vpack.c.b16 %v1179, %v1178
        %v1260 = vpack.c.b16 %v1181, %v1180
        %v1261 = vpack.c.b16 %v1183, %v1182
        %v1262 = vpack.c.b16 %v1185, %v1184
        %v1263 = vpack.c.b16 %v1187, %v1186
        %v1264 = vpack.c.b16 %v1189, %v1188
        %v1265 = vpack.c.b16 %v1191, %v1190
        %v1266 = vpack.c.b16 %v1193, %v1192
        %v1267 = vpack.c.b16 %v1195, %v1194
        %v1268 = vpack.c.b16 %v1197, %v1196
        %v1269 = vpack.c.b16 %v1199, %v1198
        %v1270 = vpack.c.b16 %v1201, %v1200
        %v1271 = vpack.c.b16 %v1203, %v1202
        %v1272 = vpack.c.b16 %v1205, %v1204
        %v1273 = vpack.c.b16 %v1207, %v1206
        %v1274 = vpack.c.b16 %v1209, %v1208
        %v1275 = vpack.c.b16 %v1211, %v1210
        %1340 = vmatpush.bf16.msra.mxu0 %v1219
        %1341 = vmatpush.bf16.msra.mxu0 %v1218
        %1342 = vmatpush.bf16.msra.mxu0 %v1217
        %1343 = vmatpush.bf16.msra.mxu0 %v1216
        %1344 = vmatpush.bf16.msra.mxu0 %v1215
        %1345 = vmatpush.bf16.msra.mxu0 %v1214
        %1346 = vmatpush.bf16.msra.mxu0 %v1213
        %1347 = vmatpush.bf16.msra.mxu0 %v1212
        %1348 = vmatmul.bf16.gmra.mxu0 %v940
        %v1349 = vpop.f32.mrf.mxu0
        %v1350 = vadd.f32 %v926, %v1349
        %v1351 = vpop.f32.mrf.mxu0
        %1352 = vdwg.mxu0
        %1353 = vmatpush.bf16.msra.mxu0 %v1227
        %1354 = vmatpush.bf16.msra.mxu0 %v1226
        %1355 = vmatpush.bf16.msra.mxu0 %v1225
        %1356 = vmatpush.bf16.msra.mxu0 %v1224
        %1357 = vmatpush.bf16.msra.mxu0 %v1223
        %1358 = vmatpush.bf16.msra.mxu0 %v1222
        %1359 = vmatpush.bf16.msra.mxu0 %v1221
        %1360 = vmatpush.bf16.msra.mxu0 %v1220
        %1361 = vmatmul.bf16.gmra.mxu0 %v941
        %v1362 = vpop.f32.mrf.mxu0
        %v1363 = vadd.f32 %v1350, %v1362
        %v1364 = vpop.f32.mrf.mxu0
        %1365 = vdwg.mxu0
        %1366 = vmatpush.bf16.msra.mxu0 %v1235
        %1367 = vmatpush.bf16.msra.mxu0 %v1234
        %1368 = vmatpush.bf16.msra.mxu0 %v1233
        %1369 = vmatpush.bf16.msra.mxu0 %v1232
        %1370 = vmatpush.bf16.msra.mxu0 %v1231
        %1371 = vmatpush.bf16.msra.mxu0 %v1230
        %1372 = vmatpush.bf16.msra.mxu0 %v1229
        %1373 = vmatpush.bf16.msra.mxu0 %v1228
        %1374 = vmatmul.bf16.gmra.mxu0 %v942
        %v1375 = vpop.f32.mrf.mxu0
        %v1376 = vadd.f32 %v1363, %v1375
        %v1377 = vpop.f32.mrf.mxu0
        %1378 = vdwg.mxu0
        %1379 = vmatpush.bf16.msra.mxu0 %v1243
        %1380 = vmatpush.bf16.msra.mxu0 %v1242
        %1381 = vmatpush.bf16.msra.mxu0 %v1241
        %1382 = vmatpush.bf16.msra.mxu0 %v1240
        %1383 = vmatpush.bf16.msra.mxu0 %v1239
        %1384 = vmatpush.bf16.msra.mxu0 %v1238
        %1385 = vmatpush.bf16.msra.mxu0 %v1237
        %1386 = vmatpush.bf16.msra.mxu0 %v1236
        %1387 = vmatmul.bf16.gmra.mxu0 %v943
        %v1388 = vpop.f32.mrf.mxu0
        %v1389 = vadd.f32 %v1376, %v1388
        %v1390 = vpop.f32.mrf.mxu0
        %1391 = vdwg.mxu0
        %1392 = vmatpush.bf16.msra.mxu0 %v1251
        %1393 = vmatpush.bf16.msra.mxu0 %v1250
        %1394 = vmatpush.bf16.msra.mxu0 %v1249
        %1395 = vmatpush.bf16.msra.mxu0 %v1248
        %1396 = vmatpush.bf16.msra.mxu0 %v1247
        %1397 = vmatpush.bf16.msra.mxu0 %v1246
        %1398 = vmatpush.bf16.msra.mxu0 %v1245
        %1399 = vmatpush.bf16.msra.mxu0 %v1244
        %1400 = vmatmul.bf16.gmra.mxu0 %v944
        %v1401 = vpop.f32.mrf.mxu0
        %v1402 = vadd.f32 %v1389, %v1401
        %v1403 = vpop.f32.mrf.mxu0
        %1404 = vdwg.mxu0
        %1405 = vmatpush.bf16.msra.mxu0 %v1259
        %1406 = vmatpush.bf16.msra.mxu0 %v1258
        %1407 = vmatpush.bf16.msra.mxu0 %v1257
        %1408 = vmatpush.bf16.msra.mxu0 %v1256
        %1409 = vmatpush.bf16.msra.mxu0 %v1255
        %1410 = vmatpush.bf16.msra.mxu0 %v1254
        %1411 = vmatpush.bf16.msra.mxu0 %v1253
        %1412 = vmatpush.bf16.msra.mxu0 %v1252
        %1413 = vmatmul.bf16.gmra.mxu0 %v945
        %v1414 = vpop.f32.mrf.mxu0
        %v1415 = vadd.f32 %v1402, %v1414
        %v1416 = vpop.f32.mrf.mxu0
        %1417 = vdwg.mxu0
        %1418 = vmatpush.bf16.msra.mxu0 %v1267
        %1419 = vmatpush.bf16.msra.mxu0 %v1266
        %1420 = vmatpush.bf16.msra.mxu0 %v1265
        %1421 = vmatpush.bf16.msra.mxu0 %v1264
        %1422 = vmatpush.bf16.msra.mxu0 %v1263
        %1423 = vmatpush.bf16.msra.mxu0 %v1262
        %1424 = vmatpush.bf16.msra.mxu0 %v1261
        %1425 = vmatpush.bf16.msra.mxu0 %v1260
        %1426 = vmatmul.bf16.gmra.mxu0 %v946
        %v1427 = vpop.f32.mrf.mxu0
        %v1428 = vadd.f32 %v1415, %v1427
        %v1429 = vpop.f32.mrf.mxu0
        %1430 = vdwg.mxu0
        %1431 = vmatpush.bf16.msra.mxu0 %v1275
        %1432 = vmatpush.bf16.msra.mxu0 %v1274
        %1433 = vmatpush.bf16.msra.mxu0 %v1273
        %1434 = vmatpush.bf16.msra.mxu0 %v1272
        %1435 = vmatpush.bf16.msra.mxu0 %v1271
        %1436 = vmatpush.bf16.msra.mxu0 %v1270
        %1437 = vmatpush.bf16.msra.mxu0 %v1269
        %1438 = vmatpush.bf16.msra.mxu0 %v1268
        %1439 = vmatmul.bf16.gmra.mxu0 %v947
        %v1440 = vpop.f32.mrf.mxu0
        %v1441 = vadd.f32 %v1428, %v1440
        %v1442 = vpop.f32.mrf.mxu0
        %1443 = vdwg.mxu0
        %v1444 = vmax.f32 %v1441, 0.0
        %v1445 = vld [vmem:[#allocation2] sm:$0xff]
        %v1446 = vld [vmem:[#allocation3] sm:$0xff]
        %v1447 = vpack.c.bf16 %v789, %v789
        %v1448 = vld [vmem:[%s9] sm:$0xff]
        %v1449 = vld [vmem:[%s9 + $0x8] sm:$0xff]
        %v1450 = vld [vmem:[%s9 + $0x10] sm:$0xff]
        %v1451 = vld [vmem:[%s9 + $0x18] sm:$0xff]
        %v1452 = vld [vmem:[%s9 + $0x20] sm:$0xff]
        %v1453 = vld [vmem:[%s9 + $0x28] sm:$0xff]
        %v1454 = vld [vmem:[%s9 + $0x30] sm:$0xff]
        %v1455 = vld [vmem:[%s9 + $0x38] sm:$0xff]
        %v1456 = vld [vmem:[%s9 + $0x40] sm:$0xff]
        %v1457 = vld [vmem:[%s9 + $0x48] sm:$0xff]
        %v1458 = vld [vmem:[%s9 + $0x50] sm:$0xff]
        %v1459 = vld [vmem:[%s9 + $0x58] sm:$0xff]
        %v1460 = vld [vmem:[%s9 + $0x60] sm:$0xff]
        %v1461 = vld [vmem:[%s9 + $0x68] sm:$0xff]
        %v1462 = vld [vmem:[%s9 + $0x70] sm:$0xff]
        %v1463 = vld [vmem:[%s9 + $0x78] sm:$0xff]
        %v1464 = vpack.c.bf16 %v1444, %v1444
        %v1465 = vld [vmem:[%s10] sm:$0xff]
        %v1466 = vld [vmem:[%s10 + $0x8] sm:$0xff]
        %v1467 = vld [vmem:[%s10 + $0x10] sm:$0xff]
        %v1468 = vld [vmem:[%s10 + $0x18] sm:$0xff]
        %v1469 = vld [vmem:[%s10 + $0x20] sm:$0xff]
        %v1470 = vld [vmem:[%s10 + $0x28] sm:$0xff]
        %v1471 = vld [vmem:[%s10 + $0x30] sm:$0xff]
        %v1472 = vld [vmem:[%s10 + $0x38] sm:$0xff]
        %v1473 = vld [vmem:[%s10 + $0x40] sm:$0xff]
        %v1474 = vld [vmem:[%s10 + $0x48] sm:$0xff]
        %v1475 = vld [vmem:[%s10 + $0x50] sm:$0xff]
        %v1476 = vld [vmem:[%s10 + $0x58] sm:$0xff]
        %v1477 = vld [vmem:[%s10 + $0x60] sm:$0xff]
        %v1478 = vld [vmem:[%s10 + $0x68] sm:$0xff]
        %v1479 = vld [vmem:[%s10 + $0x70] sm:$0xff]
        %v1480 = vld [vmem:[%s10 + $0x78] sm:$0xff]
        %v1497 = vunpack.c.l.b16 %v1465
        %v1498 = vunpack.c.h.b16 %v1465
        %v1499 = vunpack.c.l.b16 %v1466
        %v1500 = vunpack.c.h.b16 %v1466
        %v1501 = vunpack.c.l.b16 %v1467
        %v1502 = vunpack.c.h.b16 %v1467
        %v1503 = vunpack.c.l.b16 %v1468
        %v1504 = vunpack.c.h.b16 %v1468
        %v1505 = vunpack.c.l.b16 %v1469
        %v1506 = vunpack.c.h.b16 %v1469
        %v1507 = vunpack.c.l.b16 %v1470
        %v1508 = vunpack.c.h.b16 %v1470
        %v1509 = vunpack.c.l.b16 %v1471
        %v1510 = vunpack.c.h.b16 %v1471
        %v1511 = vunpack.c.l.b16 %v1472
        %v1512 = vunpack.c.h.b16 %v1472
        %v1513 = vunpack.c.l.b16 %v1473
        %v1514 = vunpack.c.h.b16 %v1473
        %v1515 = vunpack.c.l.b16 %v1474
        %v1516 = vunpack.c.h.b16 %v1474
        %v1517 = vunpack.c.l.b16 %v1475
        %v1518 = vunpack.c.h.b16 %v1475
        %v1519 = vunpack.c.l.b16 %v1476
        %v1520 = vunpack.c.h.b16 %v1476
        %v1521 = vunpack.c.l.b16 %v1477
        %v1522 = vunpack.c.h.b16 %v1477
        %v1523 = vunpack.c.l.b16 %v1478
        %v1524 = vunpack.c.h.b16 %v1478
        %v1525 = vunpack.c.l.b16 %v1479
        %v1526 = vunpack.c.h.b16 %v1479
        %v1527 = vunpack.c.l.b16 %v1480
        %v1528 = vunpack.c.h.b16 %v1480
        %v1529 = vpack.c.b16 %v1501, %v1497
        %v1530 = vpack.c.b16 %v1502, %v1498
        %v1531 = vpack.c.b16 %v1503, %v1499
        %v1532 = vpack.c.b16 %v1504, %v1500
        %v1533 = vpack.c.b16 %v1509, %v1505
        %v1534 = vpack.c.b16 %v1510, %v1506
        %v1535 = vpack.c.b16 %v1511, %v1507
        %v1536 = vpack.c.b16 %v1512, %v1508
        %v1537 = vpack.c.b16 %v1517, %v1513
        %v1538 = vpack.c.b16 %v1518, %v1514
        %v1539 = vpack.c.b16 %v1519, %v1515
        %v1540 = vpack.c.b16 %v1520, %v1516
        %v1541 = vpack.c.b16 %v1525, %v1521
        %v1542 = vpack.c.b16 %v1526, %v1522
        %v1543 = vpack.c.b16 %v1527, %v1523
        %v1544 = vpack.c.b16 %v1528, %v1524
        %v1562 = vsel %vm775, %v1464, 0
        %1564 = vmatpush.bf16.msra.mxu0 0
        %1565 = vmatpush.bf16.msra.mxu0 0
        %1566 = vmatpush.bf16.msra.mxu0 0
        %1567 = vmatpush.bf16.msra.mxu0 0
        %1568 = vmatpush.bf16.msra.mxu0 %v1541
        %1569 = vmatpush.bf16.msra.mxu0 %v1537
        %1570 = vmatpush.bf16.msra.mxu0 %v1533
        %1571 = vmatpush.bf16.msra.mxu0 %v1529
        %1572 = vmatmul.bf16.gmra.mxu0 %v1562
        %v1573 = vpop.f32.mrf.mxu0
        %v1574 = vadd.f32 0.0, %v1573
        %v1575 = vpop.f32.mrf.mxu0
        %1576 = vdwg.mxu0
        %1577 = vmatpush.bf16.msra.mxu0 0
        %1578 = vmatpush.bf16.msra.mxu0 0
        %1579 = vmatpush.bf16.msra.mxu0 0
        %1580 = vmatpush.bf16.msra.mxu0 0
        %1581 = vmatpush.bf16.msra.mxu0 %v1542
        %1582 = vmatpush.bf16.msra.mxu0 %v1538
        %1583 = vmatpush.bf16.msra.mxu0 %v1534
        %1584 = vmatpush.bf16.msra.mxu0 %v1530
        %1585 = vmatmul.bf16.gmra.mxu0 %v1562
        %v1586 = vpop.f32.mrf.mxu0
        %v1587 = vadd.f32 0.0, %v1586
        %v1588 = vpop.f32.mrf.mxu0
        %1589 = vdwg.mxu0
        %1590 = vmatpush.bf16.msra.mxu0 0
        %1591 = vmatpush.bf16.msra.mxu0 0
        %1592 = vmatpush.bf16.msra.mxu0 0
        %1593 = vmatpush.bf16.msra.mxu0 0
        %1594 = vmatpush.bf16.msra.mxu0 %v1543
        %1595 = vmatpush.bf16.msra.mxu0 %v1539
        %1596 = vmatpush.bf16.msra.mxu0 %v1535
        %1597 = vmatpush.bf16.msra.mxu0 %v1531
        %1598 = vmatmul.bf16.gmra.mxu0 %v1562
        %v1599 = vpop.f32.mrf.mxu0
        %v1600 = vadd.f32 0.0, %v1599
        %v1601 = vpop.f32.mrf.mxu0
        %1602 = vdwg.mxu0
        %1603 = vmatpush.bf16.msra.mxu0 0
        %1604 = vmatpush.bf16.msra.mxu0 0
        %1605 = vmatpush.bf16.msra.mxu0 0
        %1606 = vmatpush.bf16.msra.mxu0 0
        %1607 = vmatpush.bf16.msra.mxu0 %v1544
        %1608 = vmatpush.bf16.msra.mxu0 %v1540
        %1609 = vmatpush.bf16.msra.mxu0 %v1536
        %1610 = vmatpush.bf16.msra.mxu0 %v1532
        %1611 = vmatmul.bf16.gmra.mxu0 %v1562
        %v1612 = vpop.f32.mrf.mxu0
        %v1613 = vadd.f32 0.0, %v1612
        %v1614 = vpop.f32.mrf.mxu0
        %1615 = vdwg.mxu0
        %v1632 = vunpack.c.l.b16 %v1448
        %v1633 = vunpack.c.h.b16 %v1448
        %v1634 = vunpack.c.l.b16 %v1449
        %v1635 = vunpack.c.h.b16 %v1449
        %v1636 = vunpack.c.l.b16 %v1450
        %v1637 = vunpack.c.h.b16 %v1450
        %v1638 = vunpack.c.l.b16 %v1451
        %v1639 = vunpack.c.h.b16 %v1451
        %v1640 = vunpack.c.l.b16 %v1452
        %v1641 = vunpack.c.h.b16 %v1452
        %v1642 = vunpack.c.l.b16 %v1453
        %v1643 = vunpack.c.h.b16 %v1453
        %v1644 = vunpack.c.l.b16 %v1454
        %v1645 = vunpack.c.h.b16 %v1454
        %v1646 = vunpack.c.l.b16 %v1455
        %v1647 = vunpack.c.h.b16 %v1455
        %v1648 = vunpack.c.l.b16 %v1456
        %v1649 = vunpack.c.h.b16 %v1456
        %v1650 = vunpack.c.l.b16 %v1457
        %v1651 = vunpack.c.h.b16 %v1457
        %v1652 = vunpack.c.l.b16 %v1458
        %v1653 = vunpack.c.h.b16 %v1458
        %v1654 = vunpack.c.l.b16 %v1459
        %v1655 = vunpack.c.h.b16 %v1459
        %v1656 = vunpack.c.l.b16 %v1460
        %v1657 = vunpack.c.h.b16 %v1460
        %v1658 = vunpack.c.l.b16 %v1461
        %v1659 = vunpack.c.h.b16 %v1461
        %v1660 = vunpack.c.l.b16 %v1462
        %v1661 = vunpack.c.h.b16 %v1462
        %v1662 = vunpack.c.l.b16 %v1463
        %v1663 = vunpack.c.h.b16 %v1463
        %v1664 = vpack.c.b16 %v1636, %v1632
        %v1665 = vpack.c.b16 %v1637, %v1633
        %v1666 = vpack.c.b16 %v1638, %v1634
        %v1667 = vpack.c.b16 %v1639, %v1635
        %v1668 = vpack.c.b16 %v1644, %v1640
        %v1669 = vpack.c.b16 %v1645, %v1641
        %v1670 = vpack.c.b16 %v1646, %v1642
        %v1671 = vpack.c.b16 %v1647, %v1643
        %v1672 = vpack.c.b16 %v1652, %v1648
        %v1673 = vpack.c.b16 %v1653, %v1649
        %v1674 = vpack.c.b16 %v1654, %v1650
        %v1675 = vpack.c.b16 %v1655, %v1651
        %v1676 = vpack.c.b16 %v1660, %v1656
        %v1677 = vpack.c.b16 %v1661, %v1657
        %v1678 = vpack.c.b16 %v1662, %v1658
        %v1679 = vpack.c.b16 %v1663, %v1659
        %v1697 = vsel %vm775, %v1447, 0
        %1699 = vmatpush.bf16.msra.mxu0 0
        %1700 = vmatpush.bf16.msra.mxu0 0
        %1701 = vmatpush.bf16.msra.mxu0 0
        %1702 = vmatpush.bf16.msra.mxu0 0
        %1703 = vmatpush.bf16.msra.mxu0 %v1676
        %1704 = vmatpush.bf16.msra.mxu0 %v1672
        %1705 = vmatpush.bf16.msra.mxu0 %v1668
        %1706 = vmatpush.bf16.msra.mxu0 %v1664
        %1707 = vmatmul.bf16.gmra.mxu0 %v1697
        %v1708 = vpop.f32.mrf.mxu0
        %v1709 = vadd.f32 %v1574, %v1708
        %v1710 = vpop.f32.mrf.mxu0
        %1711 = vdwg.mxu0
        %1712 = vmatpush.bf16.msra.mxu0 0
        %1713 = vmatpush.bf16.msra.mxu0 0
        %1714 = vmatpush.bf16.msra.mxu0 0
        %1715 = vmatpush.bf16.msra.mxu0 0
        %1716 = vmatpush.bf16.msra.mxu0 %v1677
        %1717 = vmatpush.bf16.msra.mxu0 %v1673
        %1718 = vmatpush.bf16.msra.mxu0 %v1669
        %1719 = vmatpush.bf16.msra.mxu0 %v1665
        %1720 = vmatmul.bf16.gmra.mxu0 %v1697
        %v1721 = vpop.f32.mrf.mxu0
        %v1722 = vadd.f32 %v1587, %v1721
        %v1723 = vpop.f32.mrf.mxu0
        %1724 = vdwg.mxu0
        %1725 = vmatpush.bf16.msra.mxu0 0
        %1726 = vmatpush.bf16.msra.mxu0 0
        %1727 = vmatpush.bf16.msra.mxu0 0
        %1728 = vmatpush.bf16.msra.mxu0 0
        %1729 = vmatpush.bf16.msra.mxu0 %v1678
        %1730 = vmatpush.bf16.msra.mxu0 %v1674
        %1731 = vmatpush.bf16.msra.mxu0 %v1670
        %1732 = vmatpush.bf16.msra.mxu0 %v1666
        %1733 = vmatmul.bf16.gmra.mxu0 %v1697
        %v1734 = vpop.f32.mrf.mxu0
        %v1735 = vadd.f32 %v1600, %v1734
        %v1736 = vpop.f32.mrf.mxu0
        %1737 = vdwg.mxu0
        %1738 = vmatpush.bf16.msra.mxu0 0
        %1739 = vmatpush.bf16.msra.mxu0 0
        %1740 = vmatpush.bf16.msra.mxu0 0
        %1741 = vmatpush.bf16.msra.mxu0 0
        %1742 = vmatpush.bf16.msra.mxu0 %v1679
        %1743 = vmatpush.bf16.msra.mxu0 %v1675
        %1744 = vmatpush.bf16.msra.mxu0 %v1671
        %1745 = vmatpush.bf16.msra.mxu0 %v1667
        %1746 = vmatmul.bf16.gmra.mxu0 %v1697
        %v1747 = vpop.f32.mrf.mxu0
        %v1748 = vadd.f32 %v1613, %v1747
        %v1749 = vpop.f32.mrf.mxu0
        %1750 = vdwg.mxu0
        %v1751 = vpack.c.bf16 %v1445, %v1445
        %v1752 = vld [vmem:[%s11] sm:$0xff]
        %v1753 = vld [vmem:[%s11 + $0x8] sm:$0xff]
        %v1754 = vld [vmem:[%s11 + $0x10] sm:$0xff]
        %v1755 = vld [vmem:[%s11 + $0x18] sm:$0xff]
        %v1756 = vld [vmem:[%s11 + $0x20] sm:$0xff]
        %v1757 = vld [vmem:[%s11 + $0x28] sm:$0xff]
        %v1758 = vld [vmem:[%s11 + $0x30] sm:$0xff]
        %v1759 = vld [vmem:[%s11 + $0x38] sm:$0xff]
        %v1760 = vld [vmem:[%s11 + $0x40] sm:$0xff]
        %v1761 = vld [vmem:[%s11 + $0x48] sm:$0xff]
        %v1762 = vld [vmem:[%s11 + $0x50] sm:$0xff]
        %v1763 = vld [vmem:[%s11 + $0x58] sm:$0xff]
        %v1764 = vld [vmem:[%s11 + $0x60] sm:$0xff]
        %v1765 = vld [vmem:[%s11 + $0x68] sm:$0xff]
        %v1766 = vld [vmem:[%s11 + $0x70] sm:$0xff]
        %v1767 = vld [vmem:[%s11 + $0x78] sm:$0xff]
        %v1768 = vld [vmem:[%s11 + $0x80] sm:$0xff]
        %v1769 = vld [vmem:[%s11 + $0x88] sm:$0xff]
        %v1770 = vld [vmem:[%s11 + $0x90] sm:$0xff]
        %v1771 = vld [vmem:[%s11 + $0x98] sm:$0xff]
        %v1772 = vld [vmem:[%s11 + $0xa0] sm:$0xff]
        %v1773 = vld [vmem:[%s11 + $0xa8] sm:$0xff]
        %v1774 = vld [vmem:[%s11 + $0xb0] sm:$0xff]
        %v1775 = vld [vmem:[%s11 + $0xb8] sm:$0xff]
        %v1776 = vld [vmem:[%s11 + $0xc0] sm:$0xff]
        %v1777 = vld [vmem:[%s11 + $0xc8] sm:$0xff]
        %v1778 = vld [vmem:[%s11 + $0xd0] sm:$0xff]
        %v1779 = vld [vmem:[%s11 + $0xd8] sm:$0xff]
        %v1780 = vld [vmem:[%s11 + $0xe0] sm:$0xff]
        %v1781 = vld [vmem:[%s11 + $0xe8] sm:$0xff]
        %v1782 = vld [vmem:[%s11 + $0xf0] sm:$0xff]
        %v1783 = vld [vmem:[%s11 + $0xf8] sm:$0xff]
        %v1816 = vunpack.c.l.b16 %v1752
        %v1817 = vunpack.c.h.b16 %v1752
        %v1818 = vunpack.c.l.b16 %v1753
        %v1819 = vunpack.c.h.b16 %v1753
        %v1820 = vunpack.c.l.b16 %v1754
        %v1821 = vunpack.c.h.b16 %v1754
        %v1822 = vunpack.c.l.b16 %v1755
        %v1823 = vunpack.c.h.b16 %v1755
        %v1824 = vunpack.c.l.b16 %v1756
        %v1825 = vunpack.c.h.b16 %v1756
        %v1826 = vunpack.c.l.b16 %v1757
        %v1827 = vunpack.c.h.b16 %v1757
        %v1828 = vunpack.c.l.b16 %v1758
        %v1829 = vunpack.c.h.b16 %v1758
        %v1830 = vunpack.c.l.b16 %v1759
        %v1831 = vunpack.c.h.b16 %v1759
        %v1832 = vunpack.c.l.b16 %v1760
        %v1833 = vunpack.c.h.b16 %v1760
        %v1834 = vunpack.c.l.b16 %v1761
        %v1835 = vunpack.c.h.b16 %v1761
        %v1836 = vunpack.c.l.b16 %v1762
        %v1837 = vunpack.c.h.b16 %v1762
        %v1838 = vunpack.c.l.b16 %v1763
        %v1839 = vunpack.c.h.b16 %v1763
        %v1840 = vunpack.c.l.b16 %v1764
        %v1841 = vunpack.c.h.b16 %v1764
        %v1842 = vunpack.c.l.b16 %v1765
        %v1843 = vunpack.c.h.b16 %v1765
        %v1844 = vunpack.c.l.b16 %v1766
        %v1845 = vunpack.c.h.b16 %v1766
        %v1846 = vunpack.c.l.b16 %v1767
        %v1847 = vunpack.c.h.b16 %v1767
        %v1848 = vunpack.c.l.b16 %v1768
        %v1849 = vunpack.c.h.b16 %v1768
        %v1850 = vunpack.c.l.b16 %v1769
        %v1851 = vunpack.c.h.b16 %v1769
        %v1852 = vunpack.c.l.b16 %v1770
        %v1853 = vunpack.c.h.b16 %v1770
        %v1854 = vunpack.c.l.b16 %v1771
        %v1855 = vunpack.c.h.b16 %v1771
        %v1856 = vunpack.c.l.b16 %v1772
        %v1857 = vunpack.c.h.b16 %v1772
        %v1858 = vunpack.c.l.b16 %v1773
        %v1859 = vunpack.c.h.b16 %v1773
        %v1860 = vunpack.c.l.b16 %v1774
        %v1861 = vunpack.c.h.b16 %v1774
        %v1862 = vunpack.c.l.b16 %v1775
        %v1863 = vunpack.c.h.b16 %v1775
        %v1864 = vunpack.c.l.b16 %v1776
        %v1865 = vunpack.c.h.b16 %v1776
        %v1866 = vunpack.c.l.b16 %v1777
        %v1867 = vunpack.c.h.b16 %v1777
        %v1868 = vunpack.c.l.b16 %v1778
        %v1869 = vunpack.c.h.b16 %v1778
        %v1870 = vunpack.c.l.b16 %v1779
        %v1871 = vunpack.c.h.b16 %v1779
        %v1872 = vunpack.c.l.b16 %v1780
        %v1873 = vunpack.c.h.b16 %v1780
        %v1874 = vunpack.c.l.b16 %v1781
        %v1875 = vunpack.c.h.b16 %v1781
        %v1876 = vunpack.c.l.b16 %v1782
        %v1877 = vunpack.c.h.b16 %v1782
        %v1878 = vunpack.c.l.b16 %v1783
        %v1879 = vunpack.c.h.b16 %v1783
        %v1880 = vpack.c.b16 %v1820, %v1816
        %v1881 = vpack.c.b16 %v1821, %v1817
        %v1882 = vpack.c.b16 %v1822, %v1818
        %v1883 = vpack.c.b16 %v1823, %v1819
        %v1884 = vpack.c.b16 %v1828, %v1824
        %v1885 = vpack.c.b16 %v1829, %v1825
        %v1886 = vpack.c.b16 %v1830, %v1826
        %v1887 = vpack.c.b16 %v1831, %v1827
        %v1888 = vpack.c.b16 %v1836, %v1832
        %v1889 = vpack.c.b16 %v1837, %v1833
        %v1890 = vpack.c.b16 %v1838, %v1834
        %v1891 = vpack.c.b16 %v1839, %v1835
        %v1892 = vpack.c.b16 %v1844, %v1840
        %v1893 = vpack.c.b16 %v1845, %v1841
        %v1894 = vpack.c.b16 %v1846, %v1842
        %v1895 = vpack.c.b16 %v1847, %v1843
        %v1896 = vpack.c.b16 %v1852, %v1848
        %v1897 = vpack.c.b16 %v1853, %v1849
        %v1898 = vpack.c.b16 %v1854, %v1850
        %v1899 = vpack.c.b16 %v1855, %v1851
        %v1900 = vpack.c.b16 %v1860, %v1856
        %v1901 = vpack.c.b16 %v1861, %v1857
        %v1902 = vpack.c.b16 %v1862, %v1858
        %v1903 = vpack.c.b16 %v1863, %v1859
        %v1904 = vpack.c.b16 %v1868, %v1864
        %v1905 = vpack.c.b16 %v1869, %v1865
        %v1906 = vpack.c.b16 %v1870, %v1866
        %v1907 = vpack.c.b16 %v1871, %v1867
        %v1908 = vpack.c.b16 %v1876, %v1872
        %v1909 = vpack.c.b16 %v1877, %v1873
        %v1910 = vpack.c.b16 %v1878, %v1874
        %v1911 = vpack.c.b16 %v1879, %v1875
        %1944 = vmatpush.bf16.msra.mxu0 %v1908
        %1945 = vmatpush.bf16.msra.mxu0 %v1904
        %1946 = vmatpush.bf16.msra.mxu0 %v1900
        %1947 = vmatpush.bf16.msra.mxu0 %v1896
        %1948 = vmatpush.bf16.msra.mxu0 %v1892
        %1949 = vmatpush.bf16.msra.mxu0 %v1888
        %1950 = vmatpush.bf16.msra.mxu0 %v1884
        %1951 = vmatpush.bf16.msra.mxu0 %v1880
        %1952 = vmatmul.bf16.gmra.mxu0 %v1751
        %v1953 = vpop.f32.mrf.mxu0
        %v1954 = vadd.f32 0.0, %v1953
        %v1955 = vpop.f32.mrf.mxu0
        %1956 = vdwg.mxu0
        %1957 = vmatpush.bf16.msra.mxu0 %v1909
        %1958 = vmatpush.bf16.msra.mxu0 %v1905
        %1959 = vmatpush.bf16.msra.mxu0 %v1901
        %1960 = vmatpush.bf16.msra.mxu0 %v1897
        %1961 = vmatpush.bf16.msra.mxu0 %v1893
        %1962 = vmatpush.bf16.msra.mxu0 %v1889
        %1963 = vmatpush.bf16.msra.mxu0 %v1885
        %1964 = vmatpush.bf16.msra.mxu0 %v1881
        %1965 = vmatmul.bf16.gmra.mxu0 %v1751
        %v1966 = vpop.f32.mrf.mxu0
        %v1967 = vadd.f32 0.0, %v1966
        %v1968 = vpop.f32.mrf.mxu0
        %1969 = vdwg.mxu0
        %1970 = vmatpush.bf16.msra.mxu0 %v1910
        %1971 = vmatpush.bf16.msra.mxu0 %v1906
        %1972 = vmatpush.bf16.msra.mxu0 %v1902
        %1973 = vmatpush.bf16.msra.mxu0 %v1898
        %1974 = vmatpush.bf16.msra.mxu0 %v1894
        %1975 = vmatpush.bf16.msra.mxu0 %v1890
        %1976 = vmatpush.bf16.msra.mxu0 %v1886
        %1977 = vmatpush.bf16.msra.mxu0 %v1882
        %1978 = vmatmul.bf16.gmra.mxu0 %v1751
        %v1979 = vpop.f32.mrf.mxu0
        %v1980 = vadd.f32 0.0, %v1979
        %v1981 = vpop.f32.mrf.mxu0
        %1982 = vdwg.mxu0
        %1983 = vmatpush.bf16.msra.mxu0 %v1911
        %1984 = vmatpush.bf16.msra.mxu0 %v1907
        %1985 = vmatpush.bf16.msra.mxu0 %v1903
        %1986 = vmatpush.bf16.msra.mxu0 %v1899
        %1987 = vmatpush.bf16.msra.mxu0 %v1895
        %1988 = vmatpush.bf16.msra.mxu0 %v1891
        %1989 = vmatpush.bf16.msra.mxu0 %v1887
        %1990 = vmatpush.bf16.msra.mxu0 %v1883
        %1991 = vmatmul.bf16.gmra.mxu0 %v1751
        %v1992 = vpop.f32.mrf.mxu0
        %v1993 = vadd.f32 0.0, %v1992
        %v1994 = vpop.f32.mrf.mxu0
        %1995 = vdwg.mxu0
        %v1996 = vadd.f32 %v1709, %v1954
        %v1997 = vadd.f32 %v1722, %v1967
        %v1998 = vadd.f32 %v1735, %v1980
        %v1999 = vadd.f32 %v1748, %v1993
        %v2000 = vld [vmem:[%s12] sm:$0xf]
        %v2002 = vperm.slane %v2000, 0
        %v2003 = vperm.slane %v2000, 1
        %v2004 = vperm.slane %v2000, 2
        %v2005 = vperm.slane %v2000, 3
        %v2010 = vadd.f32 %v1996, %v2002
        %v2011 = vadd.f32 %v1997, %v2003
        %v2012 = vadd.f32 %v1998, %v2004
        %v2013 = vadd.f32 %v1999, %v2005
        %v2014 = vxor.u32 %v2010, 2147483648
        %v2015 = vxor.u32 %v2011, 2147483648
        %v2016 = vxor.u32 %v2012, 2147483648
        %v2017 = vmul.f32 %v2014, 1.442695
        %v2018 = vpow.pop %v2017
        %v2019 = vmul.f32 %v2015, 1.442695
        %v2020 = vpow.pop %v2019
        %v2021 = vmul.f32 %v2016, 1.442695
        %v2022 = vpow.pop %v2021
        %v2023 = vadd.f32 %v2018, 1.0
        %v2024 = vadd.f32 %v2020, 1.0
        %v2025 = vadd.f32 %v2022, 1.0
        %v2026 = vrcp.pop %v2023
        %v2027 = vmul.f32 %v2023, %v2026
        %v2028 = vsub.f32 1.0, %v2027
        %v2029 = vmul.f32 %v2026, %v2028
        %v2030 = vadd.f32 %v2026, %v2029
        %vm2031 = vweird.f32 %v2023
        %vm2032 = vweird.f32 %v2026
        %vm2033 = vmor %vm2031, %vm2032
        %v2034 = vsel %vm2033, %v2026, %v2030
        %v2035 = vand.u32 2147483647, %v2023
        %vm2036 = vcmp.eq.f32.partialorder %v2035, 8.507059e+37
        %v2037 = vand.u32 %v2023, 2147483648
        %v2038 = vor.u32 1.1754944e-38, %v2037
        %v2039 = vsel %vm2036, %v2038, %v2034
        %v2040 = vmul.f32 1.0, %v2039
        %v2041 = vrcp.pop %v2024
        %v2042 = vmul.f32 %v2024, %v2041
        %v2043 = vsub.f32 1.0, %v2042
        %v2044 = vmul.f32 %v2041, %v2043
        %v2045 = vadd.f32 %v2041, %v2044
        %vm2046 = vweird.f32 %v2024
        %vm2047 = vweird.f32 %v2041
        %vm2048 = vmor %vm2046, %vm2047
        %v2049 = vsel %vm2048, %v2041, %v2045
        %v2050 = vand.u32 2147483647, %v2024
        %vm2051 = vcmp.eq.f32.partialorder %v2050, 8.507059e+37
        %v2052 = vand.u32 %v2024, 2147483648
        %v2053 = vor.u32 1.1754944e-38, %v2052
        %v2054 = vsel %vm2051, %v2053, %v2049
        %v2055 = vmul.f32 1.0, %v2054
        %v2056 = vrcp.pop %v2025
        %v2057 = vmul.f32 %v2025, %v2056
        %v2058 = vsub.f32 1.0, %v2057
        %v2059 = vmul.f32 %v2056, %v2058
        %v2060 = vadd.f32 %v2056, %v2059
        %vm2061 = vweird.f32 %v2025
        %vm2062 = vweird.f32 %v2056
        %vm2063 = vmor %vm2061, %vm2062
        %v2064 = vsel %vm2063, %v2056, %v2060
        %v2065 = vand.u32 2147483647, %v2025
        %vm2066 = vcmp.eq.f32.partialorder %v2065, 8.507059e+37
        %v2067 = vand.u32 %v2025, 2147483648
        %v2068 = vor.u32 1.1754944e-38, %v2067
        %v2069 = vsel %vm2066, %v2068, %v2064
        %v2070 = vmul.f32 1.0, %v2069
        %v2071 = vtanh.pop %v2013
        %v2072 = vmul.f32 %v2055, %v1446
        %v2073 = vmul.f32 %v2040, %v2071
        %v2074 = vadd.f32 %v2072, %v2073
        %v2075 = vtanh.pop %v2074
        %v2076 = vmul.f32 %v2070, %v2075
        %2077 = vst [vmem:[#allocation2] sm:$0xff] %v2076
        %2078 = vst [vmem:[#allocation3] sm:$0xff] %v2074
        %v2079 = vpack.c.bf16 %v2076, %v2076
        %v2080 = vld [vmem:[%s13] sm:$0xf]
        %v2081 = vld [vmem:[%s13 + $0x4] sm:$0xf]
        %v2082 = vld [vmem:[%s13 + $0x8] sm:$0xf]
        %v2083 = vld [vmem:[%s13 + $0xc] sm:$0xf]
        %v2084 = vld [vmem:[%s13 + $0x10] sm:$0xf]
        %v2085 = vld [vmem:[%s13 + $0x14] sm:$0xf]
        %v2086 = vld [vmem:[%s13 + $0x18] sm:$0xf]
        %v2087 = vld [vmem:[%s13 + $0x1c] sm:$0xf]
        %v2088 = vld [vmem:[%s13 + $0x20] sm:$0xf]
        %v2089 = vld [vmem:[%s13 + $0x24] sm:$0xf]
        %v2090 = vld [vmem:[%s13 + $0x28] sm:$0xf]
        %v2091 = vld [vmem:[%s13 + $0x2c] sm:$0xf]
        %v2092 = vld [vmem:[%s13 + $0x30] sm:$0xf]
        %v2093 = vld [vmem:[%s13 + $0x34] sm:$0xf]
        %v2094 = vld [vmem:[%s13 + $0x38] sm:$0xf]
        %v2095 = vld [vmem:[%s13 + $0x3c] sm:$0xf]
        %v2096 = vld [vmem:[%s14] sm:$0x1]
        %v2098 = vperm.slane %v2096, 0
        %v2116 = vunpack.c.l.b16 %v2080
        %v2117 = vunpack.c.l.b16 %v2081
        %v2118 = vunpack.c.l.b16 %v2082
        %v2119 = vunpack.c.l.b16 %v2083
        %v2120 = vunpack.c.l.b16 %v2084
        %v2121 = vunpack.c.l.b16 %v2085
        %v2122 = vunpack.c.l.b16 %v2086
        %v2123 = vunpack.c.l.b16 %v2087
        %v2124 = vunpack.c.l.b16 %v2088
        %v2125 = vunpack.c.l.b16 %v2089
        %v2126 = vunpack.c.l.b16 %v2090
        %v2127 = vunpack.c.l.b16 %v2091
        %v2128 = vunpack.c.l.b16 %v2092
        %v2129 = vunpack.c.l.b16 %v2093
        %v2130 = vunpack.c.l.b16 %v2094
        %v2131 = vunpack.c.l.b16 %v2095
        %v2132 = vpack.c.b16 %v2117, %v2116
        %v2133 = vpack.c.b16 %v2119, %v2118
        %v2134 = vpack.c.b16 %v2121, %v2120
        %v2135 = vpack.c.b16 %v2123, %v2122
        %v2136 = vpack.c.b16 %v2125, %v2124
        %v2137 = vpack.c.b16 %v2127, %v2126
        %v2138 = vpack.c.b16 %v2129, %v2128
        %v2139 = vpack.c.b16 %v2131, %v2130
        %2148 = vmatpush.bf16.msra.mxu0 %v2139
        %2149 = vmatpush.bf16.msra.mxu0 %v2138
        %2150 = vmatpush.bf16.msra.mxu0 %v2137
        %2151 = vmatpush.bf16.msra.mxu0 %v2136
        %2152 = vmatpush.bf16.msra.mxu0 %v2135
        %2153 = vmatpush.bf16.msra.mxu0 %v2134
        %2154 = vmatpush.bf16.msra.mxu0 %v2133
        %2155 = vmatpush.bf16.msra.mxu0 %v2132
        %2156 = vmatmul.bf16.gmra.mxu0 %v2079
        %v2157 = vpop.f32.mrf.mxu0
        %v2158 = vadd.f32 %v2098, %v2157
        %v2159 = vpop.f32.mrf.mxu0
        %2160 = vdwg.mxu0
        %v2161 = vmax.f32 %v2158, 0.0
        %v2162 = vpack.c.bf16 %v2161, %v2161
        %v2163 = vld [vmem:[%s15] sm:$0xf]
        %v2164 = vld [vmem:[%s15 + $0x4] sm:$0xf]
        %v2165 = vld [vmem:[%s15 + $0x8] sm:$0xf]
        %v2166 = vld [vmem:[%s15 + $0xc] sm:$0xf]
        %v2167 = vld [vmem:[%s15 + $0x10] sm:$0xf]
        %v2168 = vld [vmem:[%s15 + $0x14] sm:$0xf]
        %v2169 = vld [vmem:[%s15 + $0x18] sm:$0xf]
        %v2170 = vld [vmem:[%s15 + $0x1c] sm:$0xf]
        %v2171 = vld [vmem:[%s15 + $0x20] sm:$0xf]
        %v2172 = vld [vmem:[%s15 + $0x24] sm:$0xf]
        %v2173 = vld [vmem:[%s15 + $0x28] sm:$0xf]
        %v2174 = vld [vmem:[%s15 + $0x2c] sm:$0xf]
        %v2175 = vld [vmem:[%s15 + $0x30] sm:$0xf]
        %v2176 = vld [vmem:[%s15 + $0x34] sm:$0xf]
        %v2177 = vld [vmem:[%s15 + $0x38] sm:$0xf]
        %v2178 = vld [vmem:[%s15 + $0x3c] sm:$0xf]
        %v2179 = vld [vmem:[%s16] sm:$0x1]
        %v2181 = vperm.slane %v2179, 0
        %v2199 = vunpack.c.l.b16 %v2163
        %v2200 = vunpack.c.l.b16 %v2164
        %v2201 = vunpack.c.l.b16 %v2165
        %v2202 = vunpack.c.l.b16 %v2166
        %v2203 = vunpack.c.l.b16 %v2167
        %v2204 = vunpack.c.l.b16 %v2168
        %v2205 = vunpack.c.l.b16 %v2169
        %v2206 = vunpack.c.l.b16 %v2170
        %v2207 = vunpack.c.l.b16 %v2171
        %v2208 = vunpack.c.l.b16 %v2172
        %v2209 = vunpack.c.l.b16 %v2173
        %v2210 = vunpack.c.l.b16 %v2174
        %v2211 = vunpack.c.l.b16 %v2175
        %v2212 = vunpack.c.l.b16 %v2176
        %v2213 = vunpack.c.l.b16 %v2177
        %v2214 = vunpack.c.l.b16 %v2178
        %v2215 = vpack.c.b16 %v2200, %v2199
        %v2216 = vpack.c.b16 %v2202, %v2201
        %v2217 = vpack.c.b16 %v2204, %v2203
        %v2218 = vpack.c.b16 %v2206, %v2205
        %v2219 = vpack.c.b16 %v2208, %v2207
        %v2220 = vpack.c.b16 %v2210, %v2209
        %v2221 = vpack.c.b16 %v2212, %v2211
        %v2222 = vpack.c.b16 %v2214, %v2213
        %2231 = vmatpush.bf16.msra.mxu0 %v2222
        %2232 = vmatpush.bf16.msra.mxu0 %v2221
        %2233 = vmatpush.bf16.msra.mxu0 %v2220
        %2234 = vmatpush.bf16.msra.mxu0 %v2219
        %2235 = vmatpush.bf16.msra.mxu0 %v2218
        %2236 = vmatpush.bf16.msra.mxu0 %v2217
        %2237 = vmatpush.bf16.msra.mxu0 %v2216
        %2238 = vmatpush.bf16.msra.mxu0 %v2215
        %2239 = vmatmul.bf16.gmra.mxu0 %v2162
        %v2240 = vpop.f32.mrf.mxu0
        %v2241 = vadd.f32 %v2181, %v2240
        %v2242 = vpop.f32.mrf.mxu0
        %2243 = vdwg.mxu0
        %v2244 = vmax.f32 %v2241, 0.0
        %v2245 = vpack.c.bf16 %v2244, %v2244
        %v2246 = vld [vmem:[%s17] sm:$0xf]
        %v2247 = vld [vmem:[%s17 + $0x4] sm:$0xf]
        %v2248 = vld [vmem:[%s17 + $0x8] sm:$0xf]
        %v2249 = vld [vmem:[%s17 + $0xc] sm:$0xf]
        %v2250 = vld [vmem:[%s17 + $0x10] sm:$0xf]
        %v2251 = vld [vmem:[%s17 + $0x14] sm:$0xf]
        %v2252 = vld [vmem:[%s17 + $0x18] sm:$0xf]
        %v2253 = vld [vmem:[%s17 + $0x1c] sm:$0xf]
        %v2254 = vld [vmem:[%s17 + $0x20] sm:$0xf]
        %v2255 = vld [vmem:[%s17 + $0x24] sm:$0xf]
        %v2256 = vld [vmem:[%s17 + $0x28] sm:$0xf]
        %v2257 = vld [vmem:[%s17 + $0x2c] sm:$0xf]
        %v2258 = vld [vmem:[%s17 + $0x30] sm:$0xf]
        %v2259 = vld [vmem:[%s17 + $0x34] sm:$0xf]
        %v2260 = vld [vmem:[%s17 + $0x38] sm:$0xf]
        %v2261 = vld [vmem:[%s17 + $0x3c] sm:$0xf]
        %v2262 = vld [vmem:[%s18] sm:$0x1]
        %v2264 = vperm.slane %v2262, 0
        %v2282 = vunpack.c.l.b16 %v2246
        %v2283 = vunpack.c.l.b16 %v2247
        %v2284 = vunpack.c.l.b16 %v2248
        %v2285 = vunpack.c.l.b16 %v2249
        %v2286 = vunpack.c.l.b16 %v2250
        %v2287 = vunpack.c.l.b16 %v2251
        %v2288 = vunpack.c.l.b16 %v2252
        %v2289 = vunpack.c.l.b16 %v2253
        %v2290 = vunpack.c.l.b16 %v2254
        %v2291 = vunpack.c.l.b16 %v2255
        %v2292 = vunpack.c.l.b16 %v2256
        %v2293 = vunpack.c.l.b16 %v2257
        %v2294 = vunpack.c.l.b16 %v2258
        %v2295 = vunpack.c.l.b16 %v2259
        %v2296 = vunpack.c.l.b16 %v2260
        %v2297 = vunpack.c.l.b16 %v2261
        %v2298 = vpack.c.b16 %v2283, %v2282
        %v2299 = vpack.c.b16 %v2285, %v2284
        %v2300 = vpack.c.b16 %v2287, %v2286
        %v2301 = vpack.c.b16 %v2289, %v2288
        %v2302 = vpack.c.b16 %v2291, %v2290
        %v2303 = vpack.c.b16 %v2293, %v2292
        %v2304 = vpack.c.b16 %v2295, %v2294
        %v2305 = vpack.c.b16 %v2297, %v2296
        %2314 = vmatpush.bf16.msra.mxu0 %v2305
        %2315 = vmatpush.bf16.msra.mxu0 %v2304
        %2316 = vmatpush.bf16.msra.mxu0 %v2303
        %2317 = vmatpush.bf16.msra.mxu0 %v2302
        %2318 = vmatpush.bf16.msra.mxu0 %v2301
        %2319 = vmatpush.bf16.msra.mxu0 %v2300
        %2320 = vmatpush.bf16.msra.mxu0 %v2299
        %2321 = vmatpush.bf16.msra.mxu0 %v2298
        %2322 = vmatmul.bf16.gmra.mxu0 %v2245
        %v2323 = vpop.f32.mrf.mxu0
        %v2324 = vadd.f32 %v2264, %v2323
        %v2325 = vpop.f32.mrf.mxu0
        %2326 = vdwg.mxu0
        %2327 = vmax.xlane.f32.xlu0 %v2324
        %v2328 = vpop.xlane.xlu0 %2327
        %v2329 = vsub.f32 %v2324, %v2328
        %v2330 = vmul.f32 %v2329, 1.442695
        %v2331 = vpow.pop %v2330
        %2332 = vadd.xlane.f32.xlu0 %v2331
        %v2333 = vpop.xlane.xlu0 %2332
        %v2334 = vrcp.pop %v2333
        %v2335 = vmul.f32 %v2331, %v2334
        %2336 = vst [vmem:[%s656] sm:$0xff] %v2335
        %p2337 = scmp.eq.s32.totalorder %s37, 7
        // Predicated region
        $region101: #{policy_rollout.1} parent=95 // pred_check
          %p2338 = pneg %p2337
        $region102: #{policy_rollout.1} parent=95 // pred_check_branch
          %2340 = sbr.rel (%p2338) target = $region104
        $region103: #{policy_rollout.1} parent=95 // pred_region
          %2341 = vst [vmem:[#allocation6] sm:$0xff] %v2076
          %2342 = vst [vmem:[#allocation8] sm:$0xff] %v2074
        $region104: #{policy_rollout.1} parent=95 // pred_fallthru
          _
        %s2343 = sand.u32 %s454, 1
        %s2344 = scalar_lea.sflag [#allocation5], %s2343
        %s2345 = sand.u32 %s454, 1
        %s2346 = smul.addr %s2345, 8
        %s2347 = scalar_lea.vmem [#allocation4], %s2346
        // Predicated region
        $region105: #{policy_rollout.1} parent=95 // pred_check
          %p2348 = pneg %p464
        $region106: #{policy_rollout.1} parent=95 // pred_check_branch
          %2350 = sbr.rel (%p2348) target = $region108
        $region107: #{policy_rollout.1} parent=95 // pred_region
          %2352 = vsyncadd %s2344, 0
          %s2353 = smul.addr %s37, 8
          %s2354 = scalar_lea.hbm %s19, %s2353
          %s2356 = sshll.u32 %s2347, 4
          %s2357 = int_to_ptr.vmem [resolvable:$true] %s2356
          %s2358 = sshll.u32 %s2354, 4
          %s2359 = int_to_ptr.hbm [resolvable:$true] %s2358
          %2361 = dma.vmem_to_hbm [thread:$0]  %s2357, 128, %s2359, %s2344
        $region108: #{policy_rollout.1} parent=95 // pred_fallthru
          _
        // Predicated region
        $region109: #{policy_rollout.1} parent=95 // pred_check
          %p2362 = pneg %p485
        $region110: #{policy_rollout.1} parent=95 // pred_check_branch
          %2364 = sbr.rel (%p2362) target = $region112
        $region111: #{policy_rollout.1} parent=95 // pred_region
          %2366 = vsyncadd [#allocation7], 0
          %s2368 = sshll.u32 [#allocation6], 4
          %s2369 = int_to_ptr.vmem [resolvable:$true] %s2368
          %s2370 = sshll.u32 %s20, 4
          %s2371 = int_to_ptr.hbm [resolvable:$true] %s2370
          %2373 = dma.vmem_to_hbm [thread:$0]  %s2369, 128, %s2371, [#allocation7]
        $region112: #{policy_rollout.1} parent=95 // pred_fallthru
          _
        // Predicated region
        $region113: #{policy_rollout.1} parent=95 // pred_check
          %p2374 = pneg %p506
        $region114: #{policy_rollout.1} parent=95 // pred_check_branch
          %2376 = sbr.rel (%p2374) target = $region116
        $region115: #{policy_rollout.1} parent=95 // pred_region
          %2378 = vsyncadd [#allocation7], 0
          %s2380 = sshll.u32 [#allocation8], 4
          %s2381 = int_to_ptr.vmem [resolvable:$true] %s2380
          %s2382 = sshll.u32 %s21, 4
          %s2383 = int_to_ptr.hbm [resolvable:$true] %s2382
          %2385 = dma.vmem_to_hbm [thread:$0]  %s2381, 128, %s2383, [#allocation7]
        $region116: #{policy_rollout.1} parent=95 // pred_fallthru
          _
        // Predicated region
        $region117: #{policy_rollout.1} parent=95 // pred_check
          %p2386 = pneg %p485
        $region118: #{policy_rollout.1} parent=95 // pred_check_branch
          %2388 = sbr.rel (%p2386) target = $region120
        $region119: #{policy_rollout.1} parent=95 // pred_region
          %2390 = dma.done [#allocation7], 128
        $region120: #{policy_rollout.1} parent=95 // pred_fallthru
          _
        // Predicated region
        $region121: #{policy_rollout.1} parent=95 // pred_check
          %p2391 = pneg %p506
        $region122: #{policy_rollout.1} parent=95 // pred_check_branch
          %2393 = sbr.rel (%p2391) target = $region124
        $region123: #{policy_rollout.1} parent=95 // pred_region
          %2395 = dma.done [#allocation7], 128
        $region124: #{policy_rollout.1} parent=95 // pred_fallthru
          _
      $region96: #{policy_rollout.1} parent=5 // pred_fallthru
        _
      %p2396 = scmp.le.s32.totalorder 2, %s32
      // Predicated region
      $region125: #{policy_rollout.1} parent=5 // pred_check
        %p2397 = pneg %p2396
      $region126: #{policy_rollout.1} parent=5 // pred_check_branch
        %2399 = sbr.rel (%p2397) target = $region128
      $region127: #{policy_rollout.1} parent=5 // pred_region
        %s2400 = ssub.s32 %s32, 2
        // Predicated region
        $region129: #{policy_rollout.1} parent=127 // pred_check
          %p2401 = pneg %p470
        $region130: #{policy_rollout.1} parent=127 // pred_check_branch
          %2403 = sbr.rel (%p2401) target = $region132
        $region131: #{policy_rollout.1} parent=127 // pred_region
          %s2404 = sand.u32 %s455, 1
          %s2405 = scalar_lea.sflag [#allocation5], %s2404
          %s2406 = sand.u32 %s455, 1
          %s2407 = smul.addr %s2406, 8
          %s2408 = scalar_lea.vmem [#allocation4], %s2407
          %2410 = dma.done %s2405, 128
        $region132: #{policy_rollout.1} parent=127 // pred_fallthru
          _
      $region128: #{policy_rollout.1} parent=5 // pred_fallthru
        _
    $region6: #{policy_rollout.1} parent=1 // loop_footer
      %s36 = sadd.s32 1, %s32
    $region7: #{policy_rollout.1} parent=1 // loop_footer_branch
      %31 = sbr.rel target = $region3
    $region8: #{policy_rollout.1} parent=1 // loop_exit
      _
    %2411 = vsyncpa [#allocation5], 1
    %s2412 = scalar_lea.sflag [#allocation5], 1
    %2413 = vsyncpa %s2412, 1
    %2414 = vsyncpa [#allocation7], 1

</llo_original>
